<compile_context>
chip_gen: v7x
topology: tpu7x:2x2x1
jax: 0.10.0
libtpu: 0.0.40
codegen_flags: <defaults>
</compile_context>

<pallas_src>
import functools

import jax
import jax.numpy as jnp
from jax import lax
from jax.experimental import pallas as pl
from jax.experimental.pallas import tpu as pltpu


# ---------------------------------------------------------------------------
# kernels
# ---------------------------------------------------------------------------

def _gcn_axh_kernel(a_ref, dinv_ref, h_ref, o_ref, *, relu):
    # F_out < F_in path: h = D^{-1/2} (x @ W^T) precomputed; out = D^{-1/2} (A @ h)
    a = a_ref[...].astype(jnp.bfloat16)                               # int8 -> bf16 (VPU)
    acc = jnp.dot(a, h_ref[...], preferred_element_type=jnp.float32)  # MXU, f32 acc
    out = dinv_ref[...] * acc                                         # (tm,1) broadcast mul
    if relu:
        out = jnp.maximum(out, 0.0)
    o_ref[...] = out.astype(o_ref.dtype)


def _gcn_ax_w_kernel(a_ref, dinv_ref, x_ref, wt_ref, o_ref, *, relu):
    # F_out >= F_in path: out = (D^{-1/2} (A @ (D^{-1/2} x))) @ W^T
    a = a_ref[...].astype(jnp.bfloat16)                               # int8 -> bf16
    ax = jnp.dot(a, x_ref[...], preferred_element_type=jnp.float32)   # MXU
    scaled = (dinv_ref[...] * ax).astype(jnp.bfloat16)                # keep MXU in bf16 mode
    out = jnp.dot(scaled, wt_ref[...], preferred_element_type=jnp.float32)
    if relu:
        out = jnp.maximum(out, 0.0)
    o_ref[...] = out.astype(o_ref.dtype)


# ---------------------------------------------------------------------------
# wrapper
# ---------------------------------------------------------------------------

def _vmem_capacity():
    try:
        return int(pltpu.get_tpu_info().vmem_capacity_bytes)
    except Exception:
        return 64 * 1024 * 1024                       # conservative (v7x-sized)


def _choose_row_tile(n, max_resident_bytes, max_out_row_bytes, target):
    """Largest row tile (multiple of 32, int8 tiling) that fits the VMEM budget."""
    budget = int(0.9 * _vmem_capacity()) - 2 * max_resident_bytes - (2 << 20)
    per_row = 2 * (n * 1 + max_out_row_bytes + 4)     # dbl-buffered A(int8)+out+dinv
    max_tm = max(32, budget // max(per_row, 1))
    tm = min(target, max_tm, ((n + 31) // 32) * 32)
    return max(32, (tm // 32) * 32)


def _prepare_graphs(A_views, n_pad):
    """One-time per-graph prep: deg^{-1/2} + int8 adjacency, row-padded."""
    deg = jnp.sum(A_views.astype(jnp.float32), axis=2, keepdims=True)   # [V,N,1]
    dinv = jnp.where(deg > 0.0, lax.rsqrt(deg), 0.0)                    # [V,N,1] f32
    a_i8 = A_views.astype(jnp.int8)
    pad = n_pad - A_views.shape[1]
    if pad:
        a_i8 = jnp.pad(a_i8, ((0, 0), (0, pad), (0, 0)))
        dinv_rows = jnp.pad(dinv, ((0, 0), (0, pad), (0, 0)))
    else:
        dinv_rows = dinv
    return a_i8, dinv_rows, dinv


def gcn_conv_views(x, a_i8, dinv_rows, dinv, weight, *, tm, relu=True,
                   out_dtype=jnp.float32):
    """One GCNConv layer applied to V stacked views with shared weights.

    x         : [V, N, F_in]   node features
    a_i8      : [V, N_pad, N]  int8 0/1 adjacency (rows zero-padded, self loops)
    dinv_rows : [V, N_pad, 1]  f32 deg^{-1/2} (row-padded)
    dinv      : [V, N, 1]      f32 deg^{-1/2}
    weight    : [F_out, F_in]  (nn.Linear storage)
    """
    v, n, f_in = x.shape
    n_pad = a_i8.shape[1]
    f_out = weight.shape[0]
    out_itemsize = jnp.dtype(out_dtype).itemsize
    xw_first = f_out < f_in   # run the N^2-scale matmul at the narrower feature width

    if xw_first:
        # Tiny O(N*F_in*F_out) feature transform + column scaling, once per layer in XLA.
        h = jnp.einsum("vnf,of->vno", x, weight, preferred_element_type=jnp.float32)
        h = (dinv * h).astype(jnp.bfloat16)                            # [V,N,F_out]
        kernel = functools.partial(_gcn_axh_kernel, relu=relu)
        operands = (a_i8, dinv_rows, h)
        in_specs = [
            pl.BlockSpec((None, tm, n), lambda v_, i: (v_, i, 0)),     # A row tile (streamed)
            pl.BlockSpec((None, tm, 1), lambda v_, i: (v_, i, 0)),     # deg^{-1/2} rows
            pl.BlockSpec((None, n, f_out), lambda v_, i: (v_, 0, 0)),  # h resident (bf16)
        ]
        resident_bytes = n * f_out * 2
        flops = 2 * v * n_pad * n * f_out
    else:
        x_sc = (dinv * x.astype(jnp.float32)).astype(jnp.bfloat16)     # [V,N,F_in]
        wt = weight.T.astype(jnp.bfloat16)                             # [F_in,F_out]
        kernel = functools.partial(_gcn_ax_w_kernel, relu=relu)
        operands = (a_i8, dinv_rows, x_sc, wt)
        in_specs = [
            pl.BlockSpec((None, tm, n), lambda v_, i: (v_, i, 0)),     # A row tile (streamed)
            pl.BlockSpec((None, tm, 1), lambda v_, i: (v_, i, 0)),     # deg^{-1/2} rows
            pl.BlockSpec((None, n, f_in), lambda v_, i: (v_, 0, 0)),   # x resident (bf16)
            pl.BlockSpec((f_in, f_out), lambda v_, i: (0, 0)),         # W^T resident (bf16)
        ]
        resident_bytes = n * f_in * 2 + f_in * f_out * 2
        flops = 2 * v * n_pad * (n * f_in + f_in * f_out)

    vmem_est = (2 * tm * n                        # int8 A tile, double-buffered
                + 2 * tm * 4                      # dinv tile
                + 2 * resident_bytes              # residents (conservatively x2)
                + 2 * tm * f_out * out_itemsize   # output tile, double-buffered
                + (1 << 20))
    vmem_limit = int(min(max(vmem_est + (8 << 20), 16 << 20),
                         int(0.9 * _vmem_capacity())))

    bytes_accessed = (v * n_pad * n + v * n_pad * 4 + v * resident_bytes
                      + v * n_pad * f_out * out_itemsize)

    out = pl.pallas_call(
        kernel,
        out_shape=jax.ShapeDtypeStruct((v, n_pad, f_out), out_dtype),
        grid_spec=pltpu.PrefetchScalarGridSpec(
            num_scalar_prefetch=0,
            grid=(v, n_pad // tm),
            in_specs=in_specs,
            out_specs=pl.BlockSpec((None, tm, f_out), lambda v_, i: (v_, i, 0)),
        ),
        compiler_params=pltpu.CompilerParams(
            dimension_semantics=("parallel", "parallel"),   # views x row-tiles across TCs
            vmem_limit_bytes=vmem_limit,
        ),
        cost_estimate=pl.CostEstimate(
            flops=int(flops), transcendentals=0, bytes_accessed=int(bytes_accessed)),
    )(*operands)

    return out[:, :n] if n_pad != n else out


@functools.partial(jax.jit, static_argnames=("row_tile",))
def gcn_encoder(x_views, A_views, weights, *, row_tile=256):
    """GCN.forward on V stacked views: x = relu(conv_i(x, A)) for every layer.

    x_views: [V, N, F_in], A_views: [V, N, N] dense 0/1 adjacency (self loops).
    Returns [V, N, hidden] float32.
    """
    v, n, f0 = x_views.shape
    dims = [f0] + [w.shape[0] for w in weights]

    max_resident, max_out_row = 0, 0
    for li, w in enumerate(weights):
        fi, fo = dims[li], dims[li + 1]
        res = n * fo * 2 if fo < fi else n * fi * 2 + fi * fo * 2
        max_resident = max(max_resident, res)
        out_b = 4 if li == len(weights) - 1 else 2
        max_out_row = max(max_out_row, fo * out_b)

    tm = _choose_row_tile(n, max_resident, max_out_row, row_tile)
    n_pad = pl.cdiv(n, tm) * tm
    a_i8, dinv_rows, dinv = _prepare_graphs(A_views, n_pad)   # once per graph

    h = x_views
    for li, w in enumerate(weights):
        last = li == len(weights) - 1
        h = gcn_conv_views(h, a_i8, dinv_rows, dinv, w, tm=tm, relu=True,
                           out_dtype=jnp.float32 if last else jnp.bfloat16)
    return h


def _ref_gcn_conv(x, A, w, relu=True):
    """Pure-JAX reference for one symmetric-normalized layer (f32 throughout)."""
    deg = jnp.sum(A, axis=1, keepdims=True)
    dinv = jnp.where(deg > 0.0, 1.0 / jnp.sqrt(deg), 0.0)
    out = (dinv * (A @ (dinv * x))) @ w.T
    return jnp.maximum(out, 0.0) if relu else out


# ---------------------------------------------------------------------------
# demo
# ---------------------------------------------------------------------------

if __name__ == "__main__":
    key = jax.random.PRNGKey(0)
    k_g1, k_g2, k_w1, k_w2 = jax.random.split(key, 4)

    # Small shapes consistent with ConGM(encoder='gcn', layer_num=2, hidden=128):
    #   GCN = [GCNConv(F_IN, 2*HIDDEN), GCNConv(2*HIDDEN, HIDDEN)]
    # F_IN=128 stands in for input_dim=1433; N=512 nodes per view.
    N, F_IN, HIDDEN = 512, 128, 128

    def rand_graph(k):
        ka, kx = jax.random.split(k)
        a = (jax.random.uniform(ka, (N, N)) > 0.95).astype(jnp.float32)
        a = jnp.clip(a + a.T, 0.0, 1.0)
        a = a.at[jnp.arange(N), jnp.arange(N)].set(1.0)      # self loops
        x = jax.random.normal(kx, (N, F_IN), jnp.float32)
        return x, a

    x1, A1 = rand_graph(k_g1)
    x2, A2 = rand_graph(k_g2)

    def glorot(k, shape):                                    # matches the module's glorot init
        bound = (6.0 / (shape[0] + shape[1])) ** 0.5
        return jax.random.uniform(k, shape, jnp.float32, -bound, bound)

    w1 = glorot(k_w1, (2 * HIDDEN, F_IN))    # F_out >= F_in -> ax-then-w kernel
    w2 = glorot(k_w2, (HIDDEN, 2 * HIDDEN))  # F_out <  F_in -> xw-first kernel
    weights = [w1, w2]

    x_views = jnp.stack([x1, x2])            # [2, N, F_IN]
    A_views = jnp.stack([A1, A2])            # [2, N, N]

    # Shared encoder on both views in ONE pallas_call per layer (ConGM.forward: H1, H2).
    H = gcn_encoder(x_views, A_views, weights, row_tile=256)
    H1, H2 = H[0], H[1]
    node_similarity = H1 @ H2.T              # small; left to XLA
    # TODO(synk): ConGM's loss head (scipy norm.pdf hard-negative selection,
    # data-dependent .nonzero() edge indexing, and the undefined Au/Av in the
    # reference forward) has no clean Pallas equivalent and is not translated.

    jax.block_until_ready((H, node_similarity))

    # Correctness vs pure-JAX f32 reference (bf16/int8 operand feed => loose tolerance).
    ref1, ref2 = x1, x2
    for w in weights:
        ref1 = _ref_gcn_conv(ref1, A1, w, relu=True)
        ref2 = _ref_gcn_conv(ref2, A2, w, relu=True)
    err1 = float(jnp.max(jnp.abs(H1 - ref1)) / (jnp.max(jnp.abs(ref1)) + 1e-6))
    err2 = float(jnp.max(jnp.abs(H2 - ref2)) / (jnp.max(jnp.abs(ref2)) + 1e-6))

    assert H.shape == (2, N, HIDDEN)
    assert node_similarity.shape == (N, N)
    assert bool(jnp.all(jnp.isfinite(H)))
    assert max(err1, err2) < 5e-2, f"mismatch vs reference: {err1}, {err2}"
    print("KERNEL_OK")
</pallas_src>

<mosaic_0001>
module attributes {stable_mosaic.version = 11 : i64} {
  func.func @_gcn_ax_w_kernel(%arg0: i32, %arg1: i32, %arg2: memref<1x256x512xi8, #tpu.memory_space<vmem>>, %arg3: memref<1x256x1xf32, #tpu.memory_space<vmem>>, %arg4: memref<1x512x128xbf16, #tpu.memory_space<vmem>>, %arg5: memref<128x256xbf16, #tpu.memory_space<vmem>>, %arg6: memref<1x256x256xbf16, #tpu.memory_space<vmem>>) attributes {dimension_semantics = [#tpu.dimension_semantics<parallel>, #tpu.dimension_semantics<parallel>], iteration_bounds = array<i64: 2, 2>, scalar_prefetch = 0 : i64, scratch_operands = 0 : i64, tpu.core_type = #tpu.core_type<tc>, window_params = [{transform_indices = @transform_0, window_bounds = array<i64: 1, 256, 512>}, {transform_indices = @transform_1, window_bounds = array<i64: 1, 256, 1>}, {transform_indices = @transform_2, window_bounds = array<i64: 1, 512, 128>}, {pipeline_mode = #tpu.pipeline_mode<synchronous>, transform_indices = @transform_3, window_bounds = array<i64: 128, 256>}, {transform_indices = @transform_4, window_bounds = array<i64: 1, 256, 256>}]} {
    %c0 = arith.constant 0 : index
    %c0_0 = arith.constant 0 : index
    %c0_1 = arith.constant 0 : index
    %0 = vector.load %arg2[%c0, %c0_0, %c0_1] : memref<1x256x512xi8, #tpu.memory_space<vmem>>, vector<1x256x512xi8>
    %1 = vector.shape_cast %0 : vector<1x256x512xi8> to vector<256x512xi8>
    %2 = arith.sitofp %1 : vector<256x512xi8> to vector<256x512xbf16>
    %c0_2 = arith.constant 0 : index
    %c0_3 = arith.constant 0 : index
    %c0_4 = arith.constant 0 : index
    %3 = vector.load %arg4[%c0_2, %c0_3, %c0_4] : memref<1x512x128xbf16, #tpu.memory_space<vmem>>, vector<1x512x128xbf16>
    %4 = vector.shape_cast %3 : vector<1x512x128xbf16> to vector<512x128xbf16>
    %cst = arith.constant dense<0.000000e+00> : vector<256x128xf32>
    %5 = tpu.matmul %2, %4, %cst {dimension_numbers = #tpu.dot_dimension_numbers<[1], [0], [0], [1], [0, 0, 1, 1], [], []>} : vector<256x512xbf16>, vector<512x128xbf16>, vector<256x128xf32> -> vector<256x128xf32>
    %c0_5 = arith.constant 0 : index
    %c0_6 = arith.constant 0 : index
    %c0_7 = arith.constant 0 : index
    %6 = vector.load %arg3[%c0_5, %c0_6, %c0_7] : memref<1x256x1xf32, #tpu.memory_space<vmem>>, vector<1x256x1xf32>
    %7 = vector.shape_cast %6 : vector<1x256x1xf32> to vector<256x1xf32>
    %8 = vector.broadcast %7 : vector<256x1xf32> to vector<256x128xf32>
    %9 = arith.mulf %8, %5 : vector<256x128xf32>
    %10 = arith.truncf %9 : vector<256x128xf32> to vector<256x128xbf16>
    %c0_8 = arith.constant 0 : index
    %c0_9 = arith.constant 0 : index
    %11 = vector.load %arg5[%c0_8, %c0_9] : memref<128x256xbf16, #tpu.memory_space<vmem>>, vector<128x256xbf16>
    %cst_10 = arith.constant dense<0.000000e+00> : vector<256x256xf32>
    %12 = tpu.matmul %10, %11, %cst_10 {dimension_numbers = #tpu.dot_dimension_numbers<[1], [0], [0], [1], [0, 0, 1, 1], [], []>} : vector<256x128xbf16>, vector<128x256xbf16>, vector<256x256xf32> -> vector<256x256xf32>
    %cst_11 = arith.constant 0.000000e+00 : f32
    %13 = vector.broadcast %cst_11 : f32 to vector<256x256xf32>
    %14 = arith.maximumf %12, %13 : vector<256x256xf32>
    %15 = arith.truncf %14 : vector<256x256xf32> to vector<256x256xbf16>
    %c0_12 = arith.constant 0 : index
    %c0_13 = arith.constant 0 : index
    %c0_14 = arith.constant 0 : index
    %16 = vector.load %arg6[%c0_12, %c0_13, %c0_14] : memref<1x256x256xbf16, #tpu.memory_space<vmem>>, vector<1x256x256xbf16>
    %17 = vector.shape_cast %16 : vector<1x256x256xbf16> to vector<256x256xbf16>
    %18 = vector.shape_cast %15 : vector<256x256xbf16> to vector<1x256x256xbf16>
    tpu.vector_store %arg6[%c0_12, %c0_13, %c0_14], %18 {strides = array<i32>} : memref<1x256x256xbf16, #tpu.memory_space<vmem>>, vector<1x256x256xbf16>,
    return
  }
  func.func @transform_0(%arg0: i32, %arg1: i32) -> (i32, i32, i32) {
    %c0_i32 = arith.constant 0 : i32
    %c0_i32_0 = arith.constant 0 : i32
    return %arg0, %arg1, %c0_i32 : i32, i32, i32
  }
  func.func @transform_1(%arg0: i32, %arg1: i32) -> (i32, i32, i32) {
    %c0_i32 = arith.constant 0 : i32
    %c0_i32_0 = arith.constant 0 : i32
    return %arg0, %arg1, %c0_i32 : i32, i32, i32
  }
  func.func @transform_2(%arg0: i32, %arg1: i32) -> (i32, i32, i32) {
    %c0_i32 = arith.constant 0 : i32
    %c0_i32_0 = arith.constant 0 : i32
    %c0_i32_1 = arith.constant 0 : i32
    return %arg0, %c0_i32, %c0_i32_0 : i32, i32, i32
  }
  func.func @transform_3(%arg0: i32, %arg1: i32) -> (i32, i32) {
    %c0_i32 = arith.constant 0 : i32
    %c0_i32_0 = arith.constant 0 : i32
    %c0_i32_1 = arith.constant 0 : i32
    return %c0_i32, %c0_i32_0 : i32, i32
  }
  func.func @transform_4(%arg0: i32, %arg1: i32) -> (i32, i32, i32) {
    %c0_i32 = arith.constant 0 : i32
    %c0_i32_0 = arith.constant 0 : i32
    return %arg0, %arg1, %c0_i32 : i32, i32, i32
  }
}

module attributes {stable_mosaic.version = 11 : i64} {
  func.func @_gcn_axh_kernel(%arg0: i32, %arg1: i32, %arg2: memref<1x256x512xi8, #tpu.memory_space<vmem>>, %arg3: memref<1x256x1xf32, #tpu.memory_space<vmem>>, %arg4: memref<1x512x128xbf16, #tpu.memory_space<vmem>>, %arg5: memref<1x256x128xf32, #tpu.memory_space<vmem>>) attributes {dimension_semantics = [#tpu.dimension_semantics<parallel>, #tpu.dimension_semantics<parallel>], iteration_bounds = array<i64: 2, 2>, scalar_prefetch = 0 : i64, scratch_operands = 0 : i64, tpu.core_type = #tpu.core_type<tc>, window_params = [{transform_indices = @transform_0, window_bounds = array<i64: 1, 256, 512>}, {transform_indices = @transform_1, window_bounds = array<i64: 1, 256, 1>}, {transform_indices = @transform_2, window_bounds = array<i64: 1, 512, 128>}, {transform_indices = @transform_3, window_bounds = array<i64: 1, 256, 128>}]} {
    %c0 = arith.constant 0 : index
    %c0_0 = arith.constant 0 : index
    %c0_1 = arith.constant 0 : index
    %0 = vector.load %arg2[%c0, %c0_0, %c0_1] : memref<1x256x512xi8, #tpu.memory_space<vmem>>, vector<1x256x512xi8>
    %1 = vector.shape_cast %0 : vector<1x256x512xi8> to vector<256x512xi8>
    %2 = arith.sitofp %1 : vector<256x512xi8> to vector<256x512xbf16>
    %c0_2 = arith.constant 0 : index
    %c0_3 = arith.constant 0 : index
    %c0_4 = arith.constant 0 : index
    %3 = vector.load %arg4[%c0_2, %c0_3, %c0_4] : memref<1x512x128xbf16, #tpu.memory_space<vmem>>, vector<1x512x128xbf16>
    %4 = vector.shape_cast %3 : vector<1x512x128xbf16> to vector<512x128xbf16>
    %cst = arith.constant dense<0.000000e+00> : vector<256x128xf32>
    %5 = tpu.matmul %2, %4, %cst {dimension_numbers = #tpu.dot_dimension_numbers<[1], [0], [0], [1], [0, 0, 1, 1], [], []>} : vector<256x512xbf16>, vector<512x128xbf16>, vector<256x128xf32> -> vector<256x128xf32>
    %c0_5 = arith.constant 0 : index
    %c0_6 = arith.constant 0 : index
    %c0_7 = arith.constant 0 : index
    %6 = vector.load %arg3[%c0_5, %c0_6, %c0_7] : memref<1x256x1xf32, #tpu.memory_space<vmem>>, vector<1x256x1xf32>
    %7 = vector.shape_cast %6 : vector<1x256x1xf32> to vector<256x1xf32>
    %8 = vector.broadcast %7 : vector<256x1xf32> to vector<256x128xf32>
    %9 = arith.mulf %8, %5 : vector<256x128xf32>
    %cst_8 = arith.constant 0.000000e+00 : f32
    %10 = vector.broadcast %cst_8 : f32 to vector<256x128xf32>
    %11 = arith.maximumf %9, %10 : vector<256x128xf32>
    %c0_9 = arith.constant 0 : index
    %c0_10 = arith.constant 0 : index
    %c0_11 = arith.constant 0 : index
    %12 = vector.load %arg5[%c0_9, %c0_10, %c0_11] : memref<1x256x128xf32, #tpu.memory_space<vmem>>, vector<1x256x128xf32>
    %13 = vector.shape_cast %12 : vector<1x256x128xf32> to vector<256x128xf32>
    %14 = vector.shape_cast %11 : vector<256x128xf32> to vector<1x256x128xf32>
    tpu.vector_store %arg5[%c0_9, %c0_10, %c0_11], %14 {strides = array<i32>} : memref<1x256x128xf32, #tpu.memory_space<vmem>>, vector<1x256x128xf32>,
    return
  }
  func.func @transform_0(%arg0: i32, %arg1: i32) -> (i32, i32, i32) {
    %c0_i32 = arith.constant 0 : i32
    %c0_i32_0 = arith.constant 0 : i32
    return %arg0, %arg1, %c0_i32 : i32, i32, i32
  }
  func.func @transform_1(%arg0: i32, %arg1: i32) -> (i32, i32, i32) {
    %c0_i32 = arith.constant 0 : i32
    %c0_i32_0 = arith.constant 0 : i32
    return %arg0, %arg1, %c0_i32 : i32, i32, i32
  }
  func.func @transform_2(%arg0: i32, %arg1: i32) -> (i32, i32, i32) {
    %c0_i32 = arith.constant 0 : i32
    %c0_i32_0 = arith.constant 0 : i32
    %c0_i32_1 = arith.constant 0 : i32
    return %arg0, %c0_i32, %c0_i32_0 : i32, i32, i32
  }
  func.func @transform_3(%arg0: i32, %arg1: i32) -> (i32, i32, i32) {
    %c0_i32 = arith.constant 0 : i32
    %c0_i32_0 = arith.constant 0 : i32
    return %arg0, %arg1, %c0_i32 : i32, i32, i32
  }
}

</mosaic_0001>

<llo_original>
// kernel: gcn_encoder.3
$region0: #{gcn_encoder.3}
  #allocation0 [shape = 'u32[]', space=smem, size = 0x4, offset = 0x4, fixed_abs, tag = 'smem constant byte address 0x4 - core index']
  #allocation1 [shape = 'u32[144,128]{1,0:T(1,128)}', space=vmem, size = 0x12000, scoped, tag = 'internal scratch']
  %s0 = inlined_call_operand.vmem [shape: s8[2,512,512], index: 0, kind: input, shape index: {}]
  %s1 = inlined_call_operand.vmem [shape: f32[2,512,1], index: 1, kind: input, shape index: {}]
  %s2 = inlined_call_operand.vmem [shape: bf16[2,512,128], index: 2, kind: input, shape index: {}]
  %s3 = inlined_call_operand.hbm [shape: f32[2,512,128], index: 3, kind: output, shape index: {}]
  %s4 = sld [smem:[#allocation0]]
  $region45: #{gcn_encoder.3} parent=0
    _
  %s6 = ssub.s32 1, %s4
  %s7 = scalar_select 0, %s6, %s4
  $region1: #{gcn_encoder.3} parent=0
    #allocation2 [shape = 'u8[262144]{0}', space=vmem, size = 0x40000, scoped, tag = 'output window, operand 0']
    #allocation3 [shape = 's32[2]{0}', space=sflag, size = 0x8, scoped, tag = 'scoped memory for gcn_encoder.3']
    %8 = vsyncpa [#allocation3], 0
    %s9 = scalar_lea.sflag [#allocation3], 1
    %10 = vsyncpa %s9, 0
    loop: start=0, step=1, limit=6
    $region2: #{gcn_encoder.3} parent=1 // loop_pre_header
      _
    $region3: #{gcn_encoder.3} parent=1 // loop_header
      %s12 = sphi 0, %s16
      %p13 = scmp.ge.s32.totalorder %s12, 6
      %s19 = sphi 0, %s31
      %s20 = sphi 0, %s27
      %s21 = sphi 0, %s19
      %s22 = sphi 0, %s20
      %s23 = sphi 0, %s21
      %s24 = sphi 0, %s22
      %s36 = sphi 0, %s38
      %s39 = sphi 0, %s36
      %s40 = sphi 0, %s39
      %s56 = sphi 0, %s40
      %s64 = sphi 0, %s66
      %s67 = sphi 0, %s64
      %s68 = sphi 0, %s67
      %s84 = sphi 0, %s68
      %s90 = sphi 0, %s92
      %s93 = sphi 0, %s90
      %s94 = sphi 0, %s93
      %s110 = sphi 0, %s94
      %s118 = sphi 0, %s120
      %s121 = sphi 0, %s118
      %s122 = sphi 0, %s121
      %s138 = sphi 0, %s122
    $region4: #{gcn_encoder.3} parent=1 // loop_header_branch
      %15 = sbr.rel (%p13) target = $region8
    $region5: #{gcn_encoder.3} parent=1 // loop_body
      %s17 = ssub.s32 %s12, 1
      %s18 = ssub.s32 %s12, 2
      %s25 = sadd.s32 1, %s20
      %p26 = scmp.ge.s32.totalorder %s25, 2
      %s27 = scalar_select %p26, 0, %s25
      %s28 = sadd.s32 1, %s19
      %s29 = scalar_select %p26, %s28, %s19
      %p30 = scmp.ge.s32.totalorder %s29, 2
      %s31 = scalar_select %p30, 0, %s29
      %s32 = ssub.s32 %s19, %s31
      %s33 = ssub.s32 %s20, %s27
      %s34 = sor.u32 %s32, %s33
      %p35 = scmp.eq.s32.totalorder %s34, 0
      %s37 = sadd.s32 %s36, 1
      %s38 = scalar_select %p35, %s36, %s37
      %p41 = pneg %p35
      %p42 = scmp.eq.s32.totalorder %s12, 3
      %p43 = por %p41, %p42
      %p44 = scmp.ne.s32.totalorder %s36, %s39
      %p45 = scmp.eq.s32.totalorder %s12, 0
      %p46 = por %p44, %p45
      %p47 = scmp.ne.s32.totalorder %s36, %s39
      %p48 = scmp.eq.s32.totalorder %s17, 3
      %p49 = por %p47, %p48
      %p50 = scmp.ne.s32.totalorder %s39, %s40
      %p51 = scmp.eq.s32.totalorder %s17, 0
      %p52 = por %p50, %p51
      %p53 = scmp.ne.s32.totalorder %s39, %s40
      %p54 = scmp.eq.s32.totalorder %s18, 3
      %p55 = por %p53, %p54
      %p57 = scmp.ne.s32.totalorder %s40, %s56
      %p58 = scmp.eq.s32.totalorder %s18, 0
      %p59 = por %p57, %p58
      %s60 = ssub.s32 %s19, %s31
      %s61 = ssub.s32 %s20, %s27
      %s62 = sor.u32 %s60, %s61
      %p63 = scmp.eq.s32.totalorder %s62, 0
      %s65 = sadd.s32 %s64, 1
      %s66 = scalar_select %p63, %s64, %s65
      %p69 = pneg %p63
      %p70 = scmp.eq.s32.totalorder %s12, 3
      %p71 = por %p69, %p70
      %p72 = scmp.ne.s32.totalorder %s64, %s67
      %p73 = scmp.eq.s32.totalorder %s12, 0
      %p74 = por %p72, %p73
      %p75 = scmp.ne.s32.totalorder %s64, %s67
      %p76 = scmp.eq.s32.totalorder %s17, 3
      %p77 = por %p75, %p76
      %p78 = scmp.ne.s32.totalorder %s67, %s68
      %p79 = scmp.eq.s32.totalorder %s17, 0
      %p80 = por %p78, %p79
      %p81 = scmp.ne.s32.totalorder %s67, %s68
      %p82 = scmp.eq.s32.totalorder %s18, 3
      %p83 = por %p81, %p82
      %p85 = scmp.ne.s32.totalorder %s68, %s84
      %p86 = scmp.eq.s32.totalorder %s18, 0
      %p87 = por %p85, %p86
      %s88 = ssub.s32 %s19, %s31
      %p89 = scmp.eq.s32.totalorder %s88, 0
      %s91 = sadd.s32 %s90, 1
      %s92 = scalar_select %p89, %s90, %s91
      %p95 = pneg %p89
      %p96 = scmp.eq.s32.totalorder %s12, 3
      %p97 = por %p95, %p96
      %p98 = scmp.ne.s32.totalorder %s90, %s93
      %p99 = scmp.eq.s32.totalorder %s12, 0
      %p100 = por %p98, %p99
      %p101 = scmp.ne.s32.totalorder %s90, %s93
      %p102 = scmp.eq.s32.totalorder %s17, 3
      %p103 = por %p101, %p102
      %p104 = scmp.ne.s32.totalorder %s93, %s94
      %p105 = scmp.eq.s32.totalorder %s17, 0
      %p106 = por %p104, %p105
      %p107 = scmp.ne.s32.totalorder %s93, %s94
      %p108 = scmp.eq.s32.totalorder %s18, 3
      %p109 = por %p107, %p108
      %p111 = scmp.ne.s32.totalorder %s94, %s110
      %p112 = scmp.eq.s32.totalorder %s18, 0
      %p113 = por %p111, %p112
      %s114 = ssub.s32 %s19, %s31
      %s115 = ssub.s32 %s20, %s27
      %s116 = sor.u32 %s114, %s115
      %p117 = scmp.eq.s32.totalorder %s116, 0
      %s119 = sadd.s32 %s118, 1
      %s120 = scalar_select %p117, %s118, %s119
      %p123 = pneg %p117
      %p124 = scmp.eq.s32.totalorder %s12, 3
      %p125 = por %p123, %p124
      %p126 = scmp.ne.s32.totalorder %s118, %s121
      %p127 = scmp.eq.s32.totalorder %s12, 0
      %p128 = por %p126, %p127
      %p129 = scmp.ne.s32.totalorder %s118, %s121
      %p130 = scmp.eq.s32.totalorder %s17, 3
      %p131 = por %p129, %p130
      %p132 = scmp.ne.s32.totalorder %s121, %s122
      %p133 = scmp.eq.s32.totalorder %s17, 0
      %p134 = por %p132, %p133
      %p135 = scmp.ne.s32.totalorder %s121, %s122
      %p136 = scmp.eq.s32.totalorder %s18, 3
      %p137 = por %p135, %p136
      %p139 = scmp.ne.s32.totalorder %s122, %s138
      %p140 = scmp.eq.s32.totalorder %s18, 0
      %p141 = por %p139, %p140
      %p142 = scmp.le.s32.totalorder 1, %s12
      %p143 = scmp.lt.s32.totalorder %s12, 5
      %p144 = pnand %p142, %p143
      %p145 = pneg %p144
      // Predicated region
      $region9: #{gcn_encoder.3} parent=5 // pred_check
        _
      $region10: #{gcn_encoder.3} parent=5 // pred_check_branch
        %147 = sbr.rel (%p144) target = $region12
      $region11: #{gcn_encoder.3} parent=5 // pred_region
        %s148 = ssub.s32 %s12, 1
      $region12: #{gcn_encoder.3} parent=5 // pred_fallthru
        _
      %p149 = scmp.lt.s32.totalorder %s12, 4
      // Predicated region
      $region13: #{gcn_encoder.3} parent=5 // pred_check
        %p150 = pneg %p149
      $region14: #{gcn_encoder.3} parent=5 // pred_check_branch
        %152 = sbr.rel (%p150) target = $region16
      $region15: #{gcn_encoder.3} parent=5 // pred_region
        // Predicated region
        $region17: #{gcn_encoder.3} parent=15 // pred_check
          %p153 = pneg %p46
        $region18: #{gcn_encoder.3} parent=15 // pred_check_branch
          %155 = sbr.rel (%p153) target = $region20
        $region19: #{gcn_encoder.3} parent=15 // pred_region
          %s156 = smul.u32 8, %s20
          %p157 = scmp.lt.s32.totalorder %s19, 1
          %s158 = scalar_select %p157, %s19, 1
          %p159 = scmp.lt.s32.totalorder %s156, 15
          %s160 = scalar_select %p159, %s156, 15
          %s161 = smul.addr %s160, 4
          %s162 = smul.addr %s158, 64
          %s163 = sadd.s32 %s161, %s162
          %s164 = smul.addr %s163, 8
          %s165 = scalar_lea.vmem %s0, %s164
          %s166 = smul.u32 8, %s20
        $region20: #{gcn_encoder.3} parent=15 // pred_fallthru
          _
        // Predicated region
        $region21: #{gcn_encoder.3} parent=15 // pred_check
          %p167 = pneg %p74
        $region22: #{gcn_encoder.3} parent=15 // pred_check_branch
          %169 = sbr.rel (%p167) target = $region24
        $region23: #{gcn_encoder.3} parent=15 // pred_region
          %s170 = smul.u32 32, %s20
          %p171 = scmp.lt.s32.totalorder %s19, 1
          %s172 = scalar_select %p171, %s19, 1
          %p173 = scmp.lt.s32.totalorder %s170, 63
          %s174 = scalar_select %p173, %s170, 63
          %s175 = smul.addr %s172, 64
          %s176 = sadd.s32 %s174, %s175
          %s177 = smul.addr %s176, 8
          %s178 = scalar_lea.vmem %s1, %s177
          %s179 = smul.u32 32, %s20
        $region24: #{gcn_encoder.3} parent=15 // pred_fallthru
          _
        // Predicated region
        $region25: #{gcn_encoder.3} parent=15 // pred_check
          %p180 = pneg %p100
        $region26: #{gcn_encoder.3} parent=15 // pred_check_branch
          %182 = sbr.rel (%p180) target = $region28
        $region27: #{gcn_encoder.3} parent=15 // pred_region
          %p183 = scmp.lt.s32.totalorder %s19, 1
          %s184 = scalar_select %p183, %s19, 1
          %s185 = smul.addr %s184, 64
          %s186 = smul.addr %s185, 4
          %s187 = scalar_lea.vmem %s2, %s186
        $region28: #{gcn_encoder.3} parent=15 // pred_fallthru
          _
      $region16: #{gcn_encoder.3} parent=5 // pred_fallthru
        _
      %p188 = scmp.le.s32.totalorder 1, %s12
      %p189 = scmp.lt.s32.totalorder %s12, 5
      %p190 = pnand %p188, %p189
      %p191 = pneg %p190
      // Predicated region
      $region29: #{gcn_encoder.3} parent=5 // pred_check
        _
      $region30: #{gcn_encoder.3} parent=5 // pred_check_branch
        %193 = sbr.rel (%p190) target = $region32
      $region31: #{gcn_encoder.3} parent=5 // pred_region
        %s194 = ssub.s32 %s12, 1
        %s195 = smul.u32 8, %s22
        %p196 = scmp.lt.s32.totalorder %s21, 1
        %s197 = scalar_select %p196, %s21, 1
        %p198 = scmp.lt.s32.totalorder %s195, 15
        %s199 = scalar_select %p198, %s195, 15
        %s200 = smul.addr %s199, 4
        %s201 = smul.addr %s197, 64
        %s202 = sadd.s32 %s200, %s201
        %s203 = smul.addr %s202, 8
        %s204 = scalar_lea.vmem %s0, %s203
        %p205 = pneg %p52
        %p206 = pneg %p49
        %s207 = smul.u32 32, %s22
        %p208 = scmp.lt.s32.totalorder %s21, 1
        %s209 = scalar_select %p208, %s21, 1
        %p210 = scmp.lt.s32.totalorder %s207, 63
        %s211 = scalar_select %p210, %s207, 63
        %s212 = smul.addr %s209, 64
        %s213 = sadd.s32 %s211, %s212
        %s214 = smul.addr %s213, 8
        %s215 = scalar_lea.vmem %s1, %s214
        %p216 = pneg %p80
        %p217 = pneg %p77
        %p218 = scmp.lt.s32.totalorder %s21, 1
        %s219 = scalar_select %p218, %s21, 1
        %s220 = smul.addr %s219, 64
        %s221 = smul.addr %s220, 4
        %s222 = scalar_lea.vmem %s2, %s221
        %p223 = pneg %p106
        %p224 = pneg %p103
        %p225 = pneg %p134
        %p226 = pneg %p131
        %s227 = sand.u32 %s121, 1
        %s228 = scalar_lea.sflag [#allocation3], %s227
        %s229 = sand.u32 %s121, 1
        %s230 = smul.addr %s229, 256
        %s231 = scalar_lea.vmem [#allocation2], %s230
        %s232 = smul.u32 8, %s22
        %p233 = scmp.lt.s32.totalorder %s21, 1
        %s234 = scalar_select %p233, %s21, 1
        %p235 = scmp.lt.s32.totalorder %s232, 15
        %s236 = scalar_select %p235, %s232, 15
        %s237 = smul.addr %s236, 4
        %s238 = smul.addr %s234, 64
        %s239 = sadd.s32 %s237, %s238
        %s240 = smul.addr %s239, 8
        %s241 = scalar_lea.vmem %s0, %s240
        %s242 = smul.u32 8, %s22
        %s243 = smul.u32 32, %s22
        %p244 = scmp.lt.s32.totalorder %s21, 1
        %s245 = scalar_select %p244, %s21, 1
        %p246 = scmp.lt.s32.totalorder %s243, 63
        %s247 = scalar_select %p246, %s243, 63
        %s248 = smul.addr %s245, 64
        %s249 = sadd.s32 %s247, %s248
        %s250 = smul.addr %s249, 8
        %s251 = scalar_lea.vmem %s1, %s250
        %s252 = smul.u32 32, %s22
        %p253 = scmp.lt.s32.totalorder %s21, 1
        %s254 = scalar_select %p253, %s21, 1
        %s255 = smul.addr %s254, 64
        %s256 = smul.addr %s255, 4
        %s257 = scalar_lea.vmem %s2, %s256
        %s258 = smul.u32 32, %s22
        %v260 = vld [vmem:[%s241] sm:$0xff]
        %v261 = vld [vmem:[%s241 + $0x8] sm:$0xff]
        %v262 = vld [vmem:[%s241 + $0x10] sm:$0xff]
        %v263 = vld [vmem:[%s241 + $0x18] sm:$0xff]
        %v264 = vld [vmem:[%s241 + $0x20] sm:$0xff]
        %v265 = vld [vmem:[%s241 + $0x28] sm:$0xff]
        %v266 = vld [vmem:[%s241 + $0x30] sm:$0xff]
        %v267 = vld [vmem:[%s241 + $0x38] sm:$0xff]
        %v268 = vld [vmem:[%s241 + $0x40] sm:$0xff]
        %v269 = vld [vmem:[%s241 + $0x48] sm:$0xff]
        %v270 = vld [vmem:[%s241 + $0x50] sm:$0xff]
        %v271 = vld [vmem:[%s241 + $0x58] sm:$0xff]
        %v272 = vld [vmem:[%s241 + $0x60] sm:$0xff]
        %v273 = vld [vmem:[%s241 + $0x68] sm:$0xff]
        %v274 = vld [vmem:[%s241 + $0x70] sm:$0xff]
        %v275 = vld [vmem:[%s241 + $0x78] sm:$0xff]
        %v276 = vld [vmem:[%s241 + $0x80] sm:$0xff]
        %v277 = vld [vmem:[%s241 + $0x88] sm:$0xff]
        %v278 = vld [vmem:[%s241 + $0x90] sm:$0xff]
        %v279 = vld [vmem:[%s241 + $0x98] sm:$0xff]
        %v280 = vld [vmem:[%s241 + $0xa0] sm:$0xff]
        %v281 = vld [vmem:[%s241 + $0xa8] sm:$0xff]
        %v282 = vld [vmem:[%s241 + $0xb0] sm:$0xff]
        %v283 = vld [vmem:[%s241 + $0xb8] sm:$0xff]
        %v284 = vld [vmem:[%s241 + $0xc0] sm:$0xff]
        %v285 = vld [vmem:[%s241 + $0xc8] sm:$0xff]
        %v286 = vld [vmem:[%s241 + $0xd0] sm:$0xff]
        %v287 = vld [vmem:[%s241 + $0xd8] sm:$0xff]
        %v288 = vld [vmem:[%s241 + $0xe0] sm:$0xff]
        %v289 = vld [vmem:[%s241 + $0xe8] sm:$0xff]
        %v290 = vld [vmem:[%s241 + $0xf0] sm:$0xff]
        %v291 = vld [vmem:[%s241 + $0xf8] sm:$0xff]
        %v292 = vunpack.c.l.s8.bf16 %v260
        %v293 = vunpack.c.l.s8.bf16 %v261
        %v294 = vunpack.c.l.s8.bf16 %v262
        %v295 = vunpack.c.l.s8.bf16 %v263
        %v296 = vunpack.c.h.s8.bf16 %v260
        %v297 = vunpack.c.h.s8.bf16 %v261
        %v298 = vunpack.c.h.s8.bf16 %v262
        %v299 = vunpack.c.h.s8.bf16 %v263
        %v300 = vunpack.c.l.s8.bf16 %v264
        %v301 = vunpack.c.l.s8.bf16 %v265
        %v302 = vunpack.c.l.s8.bf16 %v266
        %v303 = vunpack.c.l.s8.bf16 %v267
        %v304 = vunpack.c.h.s8.bf16 %v264
        %v305 = vunpack.c.h.s8.bf16 %v265
        %v306 = vunpack.c.h.s8.bf16 %v266
        %v307 = vunpack.c.h.s8.bf16 %v267
        %v308 = vunpack.c.l.s8.bf16 %v268
        %v309 = vunpack.c.l.s8.bf16 %v269
        %v310 = vunpack.c.l.s8.bf16 %v270
        %v311 = vunpack.c.l.s8.bf16 %v271
        %v312 = vunpack.c.h.s8.bf16 %v268
        %v313 = vunpack.c.h.s8.bf16 %v269
        %v314 = vunpack.c.h.s8.bf16 %v270
        %v315 = vunpack.c.h.s8.bf16 %v271
        %v316 = vunpack.c.l.s8.bf16 %v272
        %v317 = vunpack.c.l.s8.bf16 %v273
        %v318 = vunpack.c.l.s8.bf16 %v274
        %v319 = vunpack.c.l.s8.bf16 %v275
        %v320 = vunpack.c.h.s8.bf16 %v272
        %v321 = vunpack.c.h.s8.bf16 %v273
        %v322 = vunpack.c.h.s8.bf16 %v274
        %v323 = vunpack.c.h.s8.bf16 %v275
        %v324 = vunpack.c.l.s8.bf16 %v276
        %v325 = vunpack.c.l.s8.bf16 %v277
        %v326 = vunpack.c.l.s8.bf16 %v278
        %v327 = vunpack.c.l.s8.bf16 %v279
        %v328 = vunpack.c.h.s8.bf16 %v276
        %v329 = vunpack.c.h.s8.bf16 %v277
        %v330 = vunpack.c.h.s8.bf16 %v278
        %v331 = vunpack.c.h.s8.bf16 %v279
        %v332 = vunpack.c.l.s8.bf16 %v280
        %v333 = vunpack.c.l.s8.bf16 %v281
        %v334 = vunpack.c.l.s8.bf16 %v282
        %v335 = vunpack.c.l.s8.bf16 %v283
        %v336 = vunpack.c.h.s8.bf16 %v280
        %v337 = vunpack.c.h.s8.bf16 %v281
        %v338 = vunpack.c.h.s8.bf16 %v282
        %v339 = vunpack.c.h.s8.bf16 %v283
        %v340 = vunpack.c.l.s8.bf16 %v284
        %v341 = vunpack.c.l.s8.bf16 %v285
        %v342 = vunpack.c.l.s8.bf16 %v286
        %v343 = vunpack.c.l.s8.bf16 %v287
        %v344 = vunpack.c.h.s8.bf16 %v284
        %v345 = vunpack.c.h.s8.bf16 %v285
        %v346 = vunpack.c.h.s8.bf16 %v286
        %v347 = vunpack.c.h.s8.bf16 %v287
        %v348 = vunpack.c.l.s8.bf16 %v288
        %v349 = vunpack.c.l.s8.bf16 %v289
        %v350 = vunpack.c.l.s8.bf16 %v290
        %v351 = vunpack.c.l.s8.bf16 %v291
        %v352 = vunpack.c.h.s8.bf16 %v288
        %v353 = vunpack.c.h.s8.bf16 %v289
        %v354 = vunpack.c.h.s8.bf16 %v290
        %v355 = vunpack.c.h.s8.bf16 %v291
        %v356 = vld [vmem:[%s257] sm:$0xf]
        %v357 = vld [vmem:[%s257 + $0x4] sm:$0xf]
        %v358 = vld [vmem:[%s257 + $0x8] sm:$0xf]
        %v359 = vld [vmem:[%s257 + $0xc] sm:$0xf]
        %v360 = vld [vmem:[%s257 + $0x10] sm:$0xf]
        %v361 = vld [vmem:[%s257 + $0x14] sm:$0xf]
        %v362 = vld [vmem:[%s257 + $0x18] sm:$0xf]
        %v363 = vld [vmem:[%s257 + $0x1c] sm:$0xf]
        %v364 = vld [vmem:[%s257 + $0x20] sm:$0xf]
        %v365 = vld [vmem:[%s257 + $0x24] sm:$0xf]
        %v366 = vld [vmem:[%s257 + $0x28] sm:$0xf]
        %v367 = vld [vmem:[%s257 + $0x2c] sm:$0xf]
        %v368 = vld [vmem:[%s257 + $0x30] sm:$0xf]
        %v369 = vld [vmem:[%s257 + $0x34] sm:$0xf]
        %v370 = vld [vmem:[%s257 + $0x38] sm:$0xf]
        %v371 = vld [vmem:[%s257 + $0x3c] sm:$0xf]
        %v372 = vld [vmem:[%s257 + $0x40] sm:$0xf]
        %v373 = vld [vmem:[%s257 + $0x44] sm:$0xf]
        %v374 = vld [vmem:[%s257 + $0x48] sm:$0xf]
        %v375 = vld [vmem:[%s257 + $0x4c] sm:$0xf]
        %v376 = vld [vmem:[%s257 + $0x50] sm:$0xf]
        %v377 = vld [vmem:[%s257 + $0x54] sm:$0xf]
        %v378 = vld [vmem:[%s257 + $0x58] sm:$0xf]
        %v379 = vld [vmem:[%s257 + $0x5c] sm:$0xf]
        %v380 = vld [vmem:[%s257 + $0x60] sm:$0xf]
        %v381 = vld [vmem:[%s257 + $0x64] sm:$0xf]
        %v382 = vld [vmem:[%s257 + $0x68] sm:$0xf]
        %v383 = vld [vmem:[%s257 + $0x6c] sm:$0xf]
        %v384 = vld [vmem:[%s257 + $0x70] sm:$0xf]
        %v385 = vld [vmem:[%s257 + $0x74] sm:$0xf]
        %v386 = vld [vmem:[%s257 + $0x78] sm:$0xf]
        %v387 = vld [vmem:[%s257 + $0x7c] sm:$0xf]
        %v388 = vld [vmem:[%s257 + $0x80] sm:$0xf]
        %v389 = vld [vmem:[%s257 + $0x84] sm:$0xf]
        %v390 = vld [vmem:[%s257 + $0x88] sm:$0xf]
        %v391 = vld [vmem:[%s257 + $0x8c] sm:$0xf]
        %v392 = vld [vmem:[%s257 + $0x90] sm:$0xf]
        %v393 = vld [vmem:[%s257 + $0x94] sm:$0xf]
        %v394 = vld [vmem:[%s257 + $0x98] sm:$0xf]
        %v395 = vld [vmem:[%s257 + $0x9c] sm:$0xf]
        %v396 = vld [vmem:[%s257 + $0xa0] sm:$0xf]
        %v397 = vld [vmem:[%s257 + $0xa4] sm:$0xf]
        %v398 = vld [vmem:[%s257 + $0xa8] sm:$0xf]
        %v399 = vld [vmem:[%s257 + $0xac] sm:$0xf]
        %v400 = vld [vmem:[%s257 + $0xb0] sm:$0xf]
        %v401 = vld [vmem:[%s257 + $0xb4] sm:$0xf]
        %v402 = vld [vmem:[%s257 + $0xb8] sm:$0xf]
        %v403 = vld [vmem:[%s257 + $0xbc] sm:$0xf]
        %v404 = vld [vmem:[%s257 + $0xc0] sm:$0xf]
        %v405 = vld [vmem:[%s257 + $0xc4] sm:$0xf]
        %v406 = vld [vmem:[%s257 + $0xc8] sm:$0xf]
        %v407 = vld [vmem:[%s257 + $0xcc] sm:$0xf]
        %v408 = vld [vmem:[%s257 + $0xd0] sm:$0xf]
        %v409 = vld [vmem:[%s257 + $0xd4] sm:$0xf]
        %v410 = vld [vmem:[%s257 + $0xd8] sm:$0xf]
        %v411 = vld [vmem:[%s257 + $0xdc] sm:$0xf]
        %v412 = vld [vmem:[%s257 + $0xe0] sm:$0xf]
        %v413 = vld [vmem:[%s257 + $0xe4] sm:$0xf]
        %v414 = vld [vmem:[%s257 + $0xe8] sm:$0xf]
        %v415 = vld [vmem:[%s257 + $0xec] sm:$0xf]
        %v416 = vld [vmem:[%s257 + $0xf0] sm:$0xf]
        %v417 = vld [vmem:[%s257 + $0xf4] sm:$0xf]
        %v418 = vld [vmem:[%s257 + $0xf8] sm:$0xf]
        %v419 = vld [vmem:[%s257 + $0xfc] sm:$0xf]
        %v484 = vunpack.c.l.b16 %v356
        %v485 = vunpack.c.l.b16 %v357
        %v486 = vunpack.c.l.b16 %v358
        %v487 = vunpack.c.l.b16 %v359
        %v488 = vunpack.c.l.b16 %v360
        %v489 = vunpack.c.l.b16 %v361
        %v490 = vunpack.c.l.b16 %v362
        %v491 = vunpack.c.l.b16 %v363
        %v492 = vunpack.c.l.b16 %v364
        %v493 = vunpack.c.l.b16 %v365
        %v494 = vunpack.c.l.b16 %v366
        %v495 = vunpack.c.l.b16 %v367
        %v496 = vunpack.c.l.b16 %v368
        %v497 = vunpack.c.l.b16 %v369
        %v498 = vunpack.c.l.b16 %v370
        %v499 = vunpack.c.l.b16 %v371
        %v500 = vunpack.c.l.b16 %v372
        %v501 = vunpack.c.l.b16 %v373
        %v502 = vunpack.c.l.b16 %v374
        %v503 = vunpack.c.l.b16 %v375
        %v504 = vunpack.c.l.b16 %v376
        %v505 = vunpack.c.l.b16 %v377
        %v506 = vunpack.c.l.b16 %v378
        %v507 = vunpack.c.l.b16 %v379
        %v508 = vunpack.c.l.b16 %v380
        %v509 = vunpack.c.l.b16 %v381
        %v510 = vunpack.c.l.b16 %v382
        %v511 = vunpack.c.l.b16 %v383
        %v512 = vunpack.c.l.b16 %v384
        %v513 = vunpack.c.l.b16 %v385
        %v514 = vunpack.c.l.b16 %v386
        %v515 = vunpack.c.l.b16 %v387
        %v516 = vunpack.c.l.b16 %v388
        %v517 = vunpack.c.l.b16 %v389
        %v518 = vunpack.c.l.b16 %v390
        %v519 = vunpack.c.l.b16 %v391
        %v520 = vunpack.c.l.b16 %v392
        %v521 = vunpack.c.l.b16 %v393
        %v522 = vunpack.c.l.b16 %v394
        %v523 = vunpack.c.l.b16 %v395
        %v524 = vunpack.c.l.b16 %v396
        %v525 = vunpack.c.l.b16 %v397
        %v526 = vunpack.c.l.b16 %v398
        %v527 = vunpack.c.l.b16 %v399
        %v528 = vunpack.c.l.b16 %v400
        %v529 = vunpack.c.l.b16 %v401
        %v530 = vunpack.c.l.b16 %v402
        %v531 = vunpack.c.l.b16 %v403
        %v532 = vunpack.c.l.b16 %v404
        %v533 = vunpack.c.l.b16 %v405
        %v534 = vunpack.c.l.b16 %v406
        %v535 = vunpack.c.l.b16 %v407
        %v536 = vunpack.c.l.b16 %v408
        %v537 = vunpack.c.l.b16 %v409
        %v538 = vunpack.c.l.b16 %v410
        %v539 = vunpack.c.l.b16 %v411
        %v540 = vunpack.c.l.b16 %v412
        %v541 = vunpack.c.l.b16 %v413
        %v542 = vunpack.c.l.b16 %v414
        %v543 = vunpack.c.l.b16 %v415
        %v544 = vunpack.c.l.b16 %v416
        %v545 = vunpack.c.l.b16 %v417
        %v546 = vunpack.c.l.b16 %v418
        %v547 = vunpack.c.l.b16 %v419
        %v548 = vpack.c.b16 %v485, %v484
        %v549 = vpack.c.b16 %v487, %v486
        %v550 = vpack.c.b16 %v489, %v488
        %v551 = vpack.c.b16 %v491, %v490
        %v552 = vpack.c.b16 %v493, %v492
        %v553 = vpack.c.b16 %v495, %v494
        %v554 = vpack.c.b16 %v497, %v496
        %v555 = vpack.c.b16 %v499, %v498
        %v556 = vpack.c.b16 %v501, %v500
        %v557 = vpack.c.b16 %v503, %v502
        %v558 = vpack.c.b16 %v505, %v504
        %v559 = vpack.c.b16 %v507, %v506
        %v560 = vpack.c.b16 %v509, %v508
        %v561 = vpack.c.b16 %v511, %v510
        %v562 = vpack.c.b16 %v513, %v512
        %v563 = vpack.c.b16 %v515, %v514
        %v564 = vpack.c.b16 %v517, %v516
        %v565 = vpack.c.b16 %v519, %v518
        %v566 = vpack.c.b16 %v521, %v520
        %v567 = vpack.c.b16 %v523, %v522
        %v568 = vpack.c.b16 %v525, %v524
        %v569 = vpack.c.b16 %v527, %v526
        %v570 = vpack.c.b16 %v529, %v528
        %v571 = vpack.c.b16 %v531, %v530
        %v572 = vpack.c.b16 %v533, %v532
        %v573 = vpack.c.b16 %v535, %v534
        %v574 = vpack.c.b16 %v537, %v536
        %v575 = vpack.c.b16 %v539, %v538
        %v576 = vpack.c.b16 %v541, %v540
        %v577 = vpack.c.b16 %v543, %v542
        %v578 = vpack.c.b16 %v545, %v544
        %v579 = vpack.c.b16 %v547, %v546
        %612 = vmatprep.subr.bf16.mxu0 0
        %613 = vmatpush1.bf16.msra.mxu0 %v548
        %614 = vmatprep.subr.bf16.mxu0 0
        %615 = vmatpush1.bf16.msra.mxu0 %v549
        %616 = vmatprep.subr.bf16.mxu0 0
        %617 = vmatpush1.bf16.msra.mxu0 %v550
        %618 = vmatprep.subr.bf16.mxu0 0
        %619 = vmatpush1.bf16.msra.mxu0 %v551
        %620 = vmatprep.subr.bf16.mxu0 0
        %621 = vmatpush1.bf16.msra.mxu0 %v552
        %622 = vmatprep.subr.bf16.mxu0 0
        %623 = vmatpush1.bf16.msra.mxu0 %v553
        %624 = vmatprep.subr.bf16.mxu0 0
        %625 = vmatpush1.bf16.msra.mxu0 %v554
        %626 = vmatprep.subr.bf16.mxu0 0
        %627 = vmatpush1.bf16.msra.mxu0 %v555
        %628 = vmatprep.subr.bf16.mxu0 0
        %629 = vmatpush1.bf16.msra.mxu0 %v556
        %630 = vmatprep.subr.bf16.mxu0 0
        %631 = vmatpush1.bf16.msra.mxu0 %v557
        %632 = vmatprep.subr.bf16.mxu0 0
        %633 = vmatpush1.bf16.msra.mxu0 %v558
        %634 = vmatprep.subr.bf16.mxu0 0
        %635 = vmatpush1.bf16.msra.mxu0 %v559
        %636 = vmatprep.subr.bf16.mxu0 0
        %637 = vmatpush1.bf16.msra.mxu0 %v560
        %638 = vmatprep.subr.bf16.mxu0 0
        %639 = vmatpush1.bf16.msra.mxu0 %v561
        %640 = vmatprep.subr.bf16.mxu0 0
        %641 = vmatpush1.bf16.msra.mxu0 %v562
        %642 = vmatprep.subr.bf16.mxu0 0
        %643 = vmatpush1.bf16.msra.mxu0 %v563
        %644 = vmatprep.mubr.bf16.mxu0 %v293
        %645 = vmatmul.mubr.bf16.gmra.mrb[0].mxu0 %v292
        %v646 = vpop.f32.mrb[0].mxu0
        %v647 = vadd.f32 0.0, %v646
        %v648 = vpop.f32.mrb[0].mxu0
        %v649 = vpop.f32.mrb[0].mxu0
        %v650 = vadd.f32 0.0, %v649
        %v651 = vpop.f32.mrb[0].mxu0
        %652 = vmatprep.mubr.bf16.mxu0 %v297
        %653 = vmatmul.mubr.bf16.gmra.mrb[0].mxu0 %v296
        %v654 = vpop.f32.mrb[0].mxu0
        %v655 = vadd.f32 0.0, %v654
        %v656 = vpop.f32.mrb[0].mxu0
        %v657 = vpop.f32.mrb[0].mxu0
        %v658 = vadd.f32 0.0, %v657
        %v659 = vpop.f32.mrb[0].mxu0
        %660 = vmatprep.mubr.bf16.mxu0 %v301
        %661 = vmatmul.mubr.bf16.gmra.mrb[0].mxu0 %v300
        %v662 = vpop.f32.mrb[0].mxu0
        %v663 = vadd.f32 0.0, %v662
        %v664 = vpop.f32.mrb[0].mxu0
        %v665 = vpop.f32.mrb[0].mxu0
        %v666 = vadd.f32 0.0, %v665
        %v667 = vpop.f32.mrb[0].mxu0
        %668 = vmatprep.mubr.bf16.mxu0 %v305
        %669 = vmatmul.mubr.bf16.gmra.mrb[0].mxu0 %v304
        %v670 = vpop.f32.mrb[0].mxu0
        %v671 = vadd.f32 0.0, %v670
        %v672 = vpop.f32.mrb[0].mxu0
        %v673 = vpop.f32.mrb[0].mxu0
        %v674 = vadd.f32 0.0, %v673
        %v675 = vpop.f32.mrb[0].mxu0
        %676 = vmatprep.mubr.bf16.mxu0 %v309
        %677 = vmatmul.mubr.bf16.gmra.mrb[0].mxu0 %v308
        %v678 = vpop.f32.mrb[0].mxu0
        %v679 = vadd.f32 0.0, %v678
        %v680 = vpop.f32.mrb[0].mxu0
        %v681 = vpop.f32.mrb[0].mxu0
        %v682 = vadd.f32 0.0, %v681
        %v683 = vpop.f32.mrb[0].mxu0
        %684 = vmatprep.mubr.bf16.mxu0 %v313
        %685 = vmatmul.mubr.bf16.gmra.mrb[0].mxu0 %v312
        %v686 = vpop.f32.mrb[0].mxu0
        %v687 = vadd.f32 0.0, %v686
        %v688 = vpop.f32.mrb[0].mxu0
        %v689 = vpop.f32.mrb[0].mxu0
        %v690 = vadd.f32 0.0, %v689
        %v691 = vpop.f32.mrb[0].mxu0
        %692 = vmatprep.mubr.bf16.mxu0 %v317
        %693 = vmatmul.mubr.bf16.gmra.mrb[0].mxu0 %v316
        %v694 = vpop.f32.mrb[0].mxu0
        %v695 = vadd.f32 0.0, %v694
        %v696 = vpop.f32.mrb[0].mxu0
        %v697 = vpop.f32.mrb[0].mxu0
        %v698 = vadd.f32 0.0, %v697
        %v699 = vpop.f32.mrb[0].mxu0
        %700 = vmatprep.mubr.bf16.mxu0 %v321
        %701 = vmatmul.mubr.bf16.gmra.mrb[0].mxu0 %v320
        %v702 = vpop.f32.mrb[0].mxu0
        %v703 = vadd.f32 0.0, %v702
        %v704 = vpop.f32.mrb[0].mxu0
        %v705 = vpop.f32.mrb[0].mxu0
        %v706 = vadd.f32 0.0, %v705
        %v707 = vpop.f32.mrb[0].mxu0
        %708 = vmatprep.mubr.bf16.mxu0 %v325
        %709 = vmatmul.mubr.bf16.gmra.mrb[0].mxu0 %v324
        %v710 = vpop.f32.mrb[0].mxu0
        %v711 = vadd.f32 0.0, %v710
        %v712 = vpop.f32.mrb[0].mxu0
        %v713 = vpop.f32.mrb[0].mxu0
        %v714 = vadd.f32 0.0, %v713
        %v715 = vpop.f32.mrb[0].mxu0
        %716 = vmatprep.mubr.bf16.mxu0 %v329
        %717 = vmatmul.mubr.bf16.gmra.mrb[0].mxu0 %v328
        %v718 = vpop.f32.mrb[0].mxu0
        %v719 = vadd.f32 0.0, %v718
        %v720 = vpop.f32.mrb[0].mxu0
        %v721 = vpop.f32.mrb[0].mxu0
        %v722 = vadd.f32 0.0, %v721
        %v723 = vpop.f32.mrb[0].mxu0
        %724 = vmatprep.mubr.bf16.mxu0 %v333
        %725 = vmatmul.mubr.bf16.gmra.mrb[0].mxu0 %v332
        %v726 = vpop.f32.mrb[0].mxu0
        %v727 = vadd.f32 0.0, %v726
        %v728 = vpop.f32.mrb[0].mxu0
        %v729 = vpop.f32.mrb[0].mxu0
        %v730 = vadd.f32 0.0, %v729
        %v731 = vpop.f32.mrb[0].mxu0
        %732 = vmatprep.mubr.bf16.mxu0 %v337
        %733 = vmatmul.mubr.bf16.gmra.mrb[0].mxu0 %v336
        %v734 = vpop.f32.mrb[0].mxu0
        %v735 = vadd.f32 0.0, %v734
        %v736 = vpop.f32.mrb[0].mxu0
        %v737 = vpop.f32.mrb[0].mxu0
        %v738 = vadd.f32 0.0, %v737
        %v739 = vpop.f32.mrb[0].mxu0
        %740 = vmatprep.mubr.bf16.mxu0 %v341
        %741 = vmatmul.mubr.bf16.gmra.mrb[0].mxu0 %v340
        %v742 = vpop.f32.mrb[0].mxu0
        %v743 = vadd.f32 0.0, %v742
        %v744 = vpop.f32.mrb[0].mxu0
        %v745 = vpop.f32.mrb[0].mxu0
        %v746 = vadd.f32 0.0, %v745
        %v747 = vpop.f32.mrb[0].mxu0
        %748 = vmatprep.mubr.bf16.mxu0 %v345
        %749 = vmatmul.mubr.bf16.gmra.mrb[0].mxu0 %v344
        %v750 = vpop.f32.mrb[0].mxu0
        %v751 = vadd.f32 0.0, %v750
        %v752 = vpop.f32.mrb[0].mxu0
        %v753 = vpop.f32.mrb[0].mxu0
        %v754 = vadd.f32 0.0, %v753
        %v755 = vpop.f32.mrb[0].mxu0
        %756 = vmatprep.mubr.bf16.mxu0 %v349
        %757 = vmatmul.mubr.bf16.gmra.mrb[0].mxu0 %v348
        %v758 = vpop.f32.mrb[0].mxu0
        %v759 = vadd.f32 0.0, %v758
        %v760 = vpop.f32.mrb[0].mxu0
        %v761 = vpop.f32.mrb[0].mxu0
        %v762 = vadd.f32 0.0, %v761
        %v763 = vpop.f32.mrb[0].mxu0
        %764 = vmatprep.mubr.bf16.mxu0 %v353
        %765 = vmatmul.mubr.bf16.gmra.mrb[0].mxu0 %v352
        %v766 = vpop.f32.mrb[0].mxu0
        %v767 = vadd.f32 0.0, %v766
        %v768 = vpop.f32.mrb[0].mxu0
        %v769 = vpop.f32.mrb[0].mxu0
        %v770 = vadd.f32 0.0, %v769
        %v771 = vpop.f32.mrb[0].mxu0
        %772 = vdwg.mxu0
        %773 = vmatprep.subr.bf16.mxu0 0
        %774 = vmatpush1.bf16.msra.mxu0 %v564
        %775 = vmatprep.subr.bf16.mxu0 0
        %776 = vmatpush1.bf16.msra.mxu0 %v565
        %777 = vmatprep.subr.bf16.mxu0 0
        %778 = vmatpush1.bf16.msra.mxu0 %v566
        %779 = vmatprep.subr.bf16.mxu0 0
        %780 = vmatpush1.bf16.msra.mxu0 %v567
        %781 = vmatprep.subr.bf16.mxu0 0
        %782 = vmatpush1.bf16.msra.mxu0 %v568
        %783 = vmatprep.subr.bf16.mxu0 0
        %784 = vmatpush1.bf16.msra.mxu0 %v569
        %785 = vmatprep.subr.bf16.mxu0 0
        %786 = vmatpush1.bf16.msra.mxu0 %v570
        %787 = vmatprep.subr.bf16.mxu0 0
        %788 = vmatpush1.bf16.msra.mxu0 %v571
        %789 = vmatprep.subr.bf16.mxu0 0
        %790 = vmatpush1.bf16.msra.mxu0 %v572
        %791 = vmatprep.subr.bf16.mxu0 0
        %792 = vmatpush1.bf16.msra.mxu0 %v573
        %793 = vmatprep.subr.bf16.mxu0 0
        %794 = vmatpush1.bf16.msra.mxu0 %v574
        %795 = vmatprep.subr.bf16.mxu0 0
        %796 = vmatpush1.bf16.msra.mxu0 %v575
        %797 = vmatprep.subr.bf16.mxu0 0
        %798 = vmatpush1.bf16.msra.mxu0 %v576
        %799 = vmatprep.subr.bf16.mxu0 0
        %800 = vmatpush1.bf16.msra.mxu0 %v577
        %801 = vmatprep.subr.bf16.mxu0 0
        %802 = vmatpush1.bf16.msra.mxu0 %v578
        %803 = vmatprep.subr.bf16.mxu0 0
        %804 = vmatpush1.bf16.msra.mxu0 %v579
        %805 = vmatprep.mubr.bf16.mxu0 %v295
        %806 = vmatmul.mubr.bf16.gmra.mrb[0].mxu0 %v294
        %v807 = vpop.f32.mrb[0].mxu0
        %v808 = vadd.f32 %v647, %v807
        %v809 = vpop.f32.mrb[0].mxu0
        %v810 = vpop.f32.mrb[0].mxu0
        %v811 = vadd.f32 %v650, %v810
        %v812 = vpop.f32.mrb[0].mxu0
        %813 = vmatprep.mubr.bf16.mxu0 %v299
        %814 = vmatmul.mubr.bf16.gmra.mrb[0].mxu0 %v298
        %v815 = vpop.f32.mrb[0].mxu0
        %v816 = vadd.f32 %v655, %v815
        %v817 = vpop.f32.mrb[0].mxu0
        %v818 = vpop.f32.mrb[0].mxu0
        %v819 = vadd.f32 %v658, %v818
        %v820 = vpop.f32.mrb[0].mxu0
        %821 = vmatprep.mubr.bf16.mxu0 %v303
        %822 = vmatmul.mubr.bf16.gmra.mrb[0].mxu0 %v302
        %v823 = vpop.f32.mrb[0].mxu0
        %v824 = vadd.f32 %v663, %v823
        %v825 = vpop.f32.mrb[0].mxu0
        %v826 = vpop.f32.mrb[0].mxu0
        %v827 = vadd.f32 %v666, %v826
        %v828 = vpop.f32.mrb[0].mxu0
        %829 = vmatprep.mubr.bf16.mxu0 %v307
        %830 = vmatmul.mubr.bf16.gmra.mrb[0].mxu0 %v306
        %v831 = vpop.f32.mrb[0].mxu0
        %v832 = vadd.f32 %v671, %v831
        %v833 = vpop.f32.mrb[0].mxu0
        %v834 = vpop.f32.mrb[0].mxu0
        %v835 = vadd.f32 %v674, %v834
        %v836 = vpop.f32.mrb[0].mxu0
        %837 = vmatprep.mubr.bf16.mxu0 %v311
        %838 = vmatmul.mubr.bf16.gmra.mrb[0].mxu0 %v310
        %v839 = vpop.f32.mrb[0].mxu0
        %v840 = vadd.f32 %v679, %v839
        %v841 = vpop.f32.mrb[0].mxu0
        %v842 = vpop.f32.mrb[0].mxu0
        %v843 = vadd.f32 %v682, %v842
        %v844 = vpop.f32.mrb[0].mxu0
        %845 = vmatprep.mubr.bf16.mxu0 %v315
        %846 = vmatmul.mubr.bf16.gmra.mrb[0].mxu0 %v314
        %v847 = vpop.f32.mrb[0].mxu0
        %v848 = vadd.f32 %v687, %v847
        %v849 = vpop.f32.mrb[0].mxu0
        %v850 = vpop.f32.mrb[0].mxu0
        %v851 = vadd.f32 %v690, %v850
        %v852 = vpop.f32.mrb[0].mxu0
        %853 = vmatprep.mubr.bf16.mxu0 %v319
        %854 = vmatmul.mubr.bf16.gmra.mrb[0].mxu0 %v318
        %v855 = vpop.f32.mrb[0].mxu0
        %v856 = vadd.f32 %v695, %v855
        %v857 = vpop.f32.mrb[0].mxu0
        %v858 = vpop.f32.mrb[0].mxu0
        %v859 = vadd.f32 %v698, %v858
        %v860 = vpop.f32.mrb[0].mxu0
        %861 = vmatprep.mubr.bf16.mxu0 %v323
        %862 = vmatmul.mubr.bf16.gmra.mrb[0].mxu0 %v322
        %v863 = vpop.f32.mrb[0].mxu0
        %v864 = vadd.f32 %v703, %v863
        %v865 = vpop.f32.mrb[0].mxu0
        %v866 = vpop.f32.mrb[0].mxu0
        %v867 = vadd.f32 %v706, %v866
        %v868 = vpop.f32.mrb[0].mxu0
        %869 = vmatprep.mubr.bf16.mxu0 %v327
        %870 = vmatmul.mubr.bf16.gmra.mrb[0].mxu0 %v326
        %v871 = vpop.f32.mrb[0].mxu0
        %v872 = vadd.f32 %v711, %v871
        %v873 = vpop.f32.mrb[0].mxu0
        %v874 = vpop.f32.mrb[0].mxu0
        %v875 = vadd.f32 %v714, %v874
        %v876 = vpop.f32.mrb[0].mxu0
        %877 = vmatprep.mubr.bf16.mxu0 %v331
        %878 = vmatmul.mubr.bf16.gmra.mrb[0].mxu0 %v330
        %v879 = vpop.f32.mrb[0].mxu0
        %v880 = vadd.f32 %v719, %v879
        %v881 = vpop.f32.mrb[0].mxu0
        %v882 = vpop.f32.mrb[0].mxu0
        %v883 = vadd.f32 %v722, %v882
        %v884 = vpop.f32.mrb[0].mxu0
        %885 = vmatprep.mubr.bf16.mxu0 %v335
        %886 = vmatmul.mubr.bf16.gmra.mrb[0].mxu0 %v334
        %v887 = vpop.f32.mrb[0].mxu0
        %v888 = vadd.f32 %v727, %v887
        %v889 = vpop.f32.mrb[0].mxu0
        %v890 = vpop.f32.mrb[0].mxu0
        %v891 = vadd.f32 %v730, %v890
        %v892 = vpop.f32.mrb[0].mxu0
        %893 = vmatprep.mubr.bf16.mxu0 %v339
        %894 = vmatmul.mubr.bf16.gmra.mrb[0].mxu0 %v338
        %v895 = vpop.f32.mrb[0].mxu0
        %v896 = vadd.f32 %v735, %v895
        %v897 = vpop.f32.mrb[0].mxu0
        %v898 = vpop.f32.mrb[0].mxu0
        %v899 = vadd.f32 %v738, %v898
        %v900 = vpop.f32.mrb[0].mxu0
        %901 = vmatprep.mubr.bf16.mxu0 %v343
        %902 = vmatmul.mubr.bf16.gmra.mrb[0].mxu0 %v342
        %v903 = vpop.f32.mrb[0].mxu0
        %v904 = vadd.f32 %v743, %v903
        %v905 = vpop.f32.mrb[0].mxu0
        %v906 = vpop.f32.mrb[0].mxu0
        %v907 = vadd.f32 %v746, %v906
        %v908 = vpop.f32.mrb[0].mxu0
        %909 = vmatprep.mubr.bf16.mxu0 %v347
        %910 = vmatmul.mubr.bf16.gmra.mrb[0].mxu0 %v346
        %v911 = vpop.f32.mrb[0].mxu0
        %v912 = vadd.f32 %v751, %v911
        %v913 = vpop.f32.mrb[0].mxu0
        %v914 = vpop.f32.mrb[0].mxu0
        %v915 = vadd.f32 %v754, %v914
        %v916 = vpop.f32.mrb[0].mxu0
        %917 = vmatprep.mubr.bf16.mxu0 %v351
        %918 = vmatmul.mubr.bf16.gmra.mrb[0].mxu0 %v350
        %v919 = vpop.f32.mrb[0].mxu0
        %v920 = vadd.f32 %v759, %v919
        %v921 = vpop.f32.mrb[0].mxu0
        %v922 = vpop.f32.mrb[0].mxu0
        %v923 = vadd.f32 %v762, %v922
        %v924 = vpop.f32.mrb[0].mxu0
        %925 = vmatprep.mubr.bf16.mxu0 %v355
        %926 = vmatmul.mubr.bf16.gmra.mrb[0].mxu0 %v354
        %v927 = vpop.f32.mrb[0].mxu0
        %v928 = vadd.f32 %v767, %v927
        %v929 = vpop.f32.mrb[0].mxu0
        %v930 = vpop.f32.mrb[0].mxu0
        %v931 = vadd.f32 %v770, %v930
        %v932 = vpop.f32.mrb[0].mxu0
        %933 = vdwg.mxu0
        %v934 = vld [vmem:[%s251] sm:$0xff]
        %v935 = vld [vmem:[%s251 + $0x8] sm:$0xff]
        %v936 = vld [vmem:[%s251 + $0x10] sm:$0xff]
        %v937 = vld [vmem:[%s251 + $0x18] sm:$0xff]
        %v938 = vld [vmem:[%s251 + $0x20] sm:$0xff]
        %v939 = vld [vmem:[%s251 + $0x28] sm:$0xff]
        %v940 = vld [vmem:[%s251 + $0x30] sm:$0xff]
        %v941 = vld [vmem:[%s251 + $0x38] sm:$0xff]
        %v942 = vld [vmem:[%s251 + $0x40] sm:$0xff]
        %v943 = vld [vmem:[%s251 + $0x48] sm:$0xff]
        %v944 = vld [vmem:[%s251 + $0x50] sm:$0xff]
        %v945 = vld [vmem:[%s251 + $0x58] sm:$0xff]
        %v946 = vld [vmem:[%s251 + $0x60] sm:$0xff]
        %v947 = vld [vmem:[%s251 + $0x68] sm:$0xff]
        %v948 = vld [vmem:[%s251 + $0x70] sm:$0xff]
        %v949 = vld [vmem:[%s251 + $0x78] sm:$0xff]
        %v950 = vld [vmem:[%s251 + $0x80] sm:$0xff]
        %v951 = vld [vmem:[%s251 + $0x88] sm:$0xff]
        %v952 = vld [vmem:[%s251 + $0x90] sm:$0xff]
        %v953 = vld [vmem:[%s251 + $0x98] sm:$0xff]
        %v954 = vld [vmem:[%s251 + $0xa0] sm:$0xff]
        %v955 = vld [vmem:[%s251 + $0xa8] sm:$0xff]
        %v956 = vld [vmem:[%s251 + $0xb0] sm:$0xff]
        %v957 = vld [vmem:[%s251 + $0xb8] sm:$0xff]
        %v958 = vld [vmem:[%s251 + $0xc0] sm:$0xff]
        %v959 = vld [vmem:[%s251 + $0xc8] sm:$0xff]
        %v960 = vld [vmem:[%s251 + $0xd0] sm:$0xff]
        %v961 = vld [vmem:[%s251 + $0xd8] sm:$0xff]
        %v962 = vld [vmem:[%s251 + $0xe0] sm:$0xff]
        %v963 = vld [vmem:[%s251 + $0xe8] sm:$0xff]
        %v964 = vld [vmem:[%s251 + $0xf0] sm:$0xff]
        %v965 = vld [vmem:[%s251 + $0xf8] sm:$0xff]
        %967 = vset.pattern.permute.xlu0 0
        %968 = vperm.xlu0 %967, %v934
        %v969 = vpop.permute.xlu0 %968
        %972 = vset.pattern.permute.xlu0 0
        %973 = vperm.xlu0 %972, %v935
        %v974 = vpop.permute.xlu0 %973
        %977 = vset.pattern.permute.xlu0 0
        %978 = vperm.xlu0 %977, %v936
        %v979 = vpop.permute.xlu0 %978
        %982 = vset.pattern.permute.xlu0 0
        %983 = vperm.xlu0 %982, %v937
        %v984 = vpop.permute.xlu0 %983
        %987 = vset.pattern.permute.xlu0 0
        %988 = vperm.xlu0 %987, %v938
        %v989 = vpop.permute.xlu0 %988
        %992 = vset.pattern.permute.xlu0 0
        %993 = vperm.xlu0 %992, %v939
        %v994 = vpop.permute.xlu0 %993
        %997 = vset.pattern.permute.xlu0 0
        %998 = vperm.xlu0 %997, %v940
        %v999 = vpop.permute.xlu0 %998
        %1002 = vset.pattern.permute.xlu0 0
        %1003 = vperm.xlu0 %1002, %v941
        %v1004 = vpop.permute.xlu0 %1003
        %1007 = vset.pattern.permute.xlu0 0
        %1008 = vperm.xlu0 %1007, %v942
        %v1009 = vpop.permute.xlu0 %1008
        %1012 = vset.pattern.permute.xlu0 0
        %1013 = vperm.xlu0 %1012, %v943
        %v1014 = vpop.permute.xlu0 %1013
        %1017 = vset.pattern.permute.xlu0 0
        %1018 = vperm.xlu0 %1017, %v944
        %v1019 = vpop.permute.xlu0 %1018
        %1022 = vset.pattern.permute.xlu0 0
        %1023 = vperm.xlu0 %1022, %v945
        %v1024 = vpop.permute.xlu0 %1023
        %1027 = vset.pattern.permute.xlu0 0
        %1028 = vperm.xlu0 %1027, %v946
        %v1029 = vpop.permute.xlu0 %1028
        %1032 = vset.pattern.permute.xlu0 0
        %1033 = vperm.xlu0 %1032, %v947
        %v1034 = vpop.permute.xlu0 %1033
        %1037 = vset.pattern.permute.xlu0 0
        %1038 = vperm.xlu0 %1037, %v948
        %v1039 = vpop.permute.xlu0 %1038
        %1042 = vset.pattern.permute.xlu0 0
        %1043 = vperm.xlu0 %1042, %v949
        %v1044 = vpop.permute.xlu0 %1043
        %1047 = vset.pattern.permute.xlu0 0
        %1048 = vperm.xlu0 %1047, %v950
        %v1049 = vpop.permute.xlu0 %1048
        %1052 = vset.pattern.permute.xlu0 0
        %1053 = vperm.xlu0 %1052, %v951
        %v1054 = vpop.permute.xlu0 %1053
        %1057 = vset.pattern.permute.xlu0 0
        %1058 = vperm.xlu0 %1057, %v952
        %v1059 = vpop.permute.xlu0 %1058
        %1062 = vset.pattern.permute.xlu0 0
        %1063 = vperm.xlu0 %1062, %v953
        %v1064 = vpop.permute.xlu0 %1063
        %1067 = vset.pattern.permute.xlu0 0
        %1068 = vperm.xlu0 %1067, %v954
        %v1069 = vpop.permute.xlu0 %1068
        %1072 = vset.pattern.permute.xlu0 0
        %1073 = vperm.xlu0 %1072, %v955
        %v1074 = vpop.permute.xlu0 %1073
        %1077 = vset.pattern.permute.xlu0 0
        %1078 = vperm.xlu0 %1077, %v956
        %v1079 = vpop.permute.xlu0 %1078
        %1082 = vset.pattern.permute.xlu0 0
        %1083 = vperm.xlu0 %1082, %v957
        %v1084 = vpop.permute.xlu0 %1083
        %1087 = vset.pattern.permute.xlu0 0
        %1088 = vperm.xlu0 %1087, %v958
        %v1089 = vpop.permute.xlu0 %1088
        %1092 = vset.pattern.permute.xlu0 0
        %1093 = vperm.xlu0 %1092, %v959
        %v1094 = vpop.permute.xlu0 %1093
        %1097 = vset.pattern.permute.xlu0 0
        %1098 = vperm.xlu0 %1097, %v960
        %v1099 = vpop.permute.xlu0 %1098
        %1102 = vset.pattern.permute.xlu0 0
        %1103 = vperm.xlu0 %1102, %v961
        %v1104 = vpop.permute.xlu0 %1103
        %1107 = vset.pattern.permute.xlu0 0
        %1108 = vperm.xlu0 %1107, %v962
        %v1109 = vpop.permute.xlu0 %1108
        %1112 = vset.pattern.permute.xlu0 0
        %1113 = vperm.xlu0 %1112, %v963
        %v1114 = vpop.permute.xlu0 %1113
        %1117 = vset.pattern.permute.xlu0 0
        %1118 = vperm.xlu0 %1117, %v964
        %v1119 = vpop.permute.xlu0 %1118
        %1122 = vset.pattern.permute.xlu0 0
        %1123 = vperm.xlu0 %1122, %v965
        %v1124 = vpop.permute.xlu0 %1123
        %v1126 = vmul.f32 %v969, %v808
        %v1127 = vmul.f32 %v974, %v811
        %v1128 = vmul.f32 %v979, %v816
        %v1129 = vmul.f32 %v984, %v819
        %v1130 = vmul.f32 %v989, %v824
        %v1131 = vmul.f32 %v994, %v827
        %v1132 = vmul.f32 %v999, %v832
        %v1133 = vmul.f32 %v1004, %v835
        %v1134 = vmul.f32 %v1009, %v840
        %v1135 = vmul.f32 %v1014, %v843
        %v1136 = vmul.f32 %v1019, %v848
        %v1137 = vmul.f32 %v1024, %v851
        %v1138 = vmul.f32 %v1029, %v856
        %v1139 = vmul.f32 %v1034, %v859
        %v1140 = vmul.f32 %v1039, %v864
        %v1141 = vmul.f32 %v1044, %v867
        %v1142 = vmul.f32 %v1049, %v872
        %v1143 = vmul.f32 %v1054, %v875
        %v1144 = vmul.f32 %v1059, %v880
        %v1145 = vmul.f32 %v1064, %v883
        %v1146 = vmul.f32 %v1069, %v888
        %v1147 = vmul.f32 %v1074, %v891
        %v1148 = vmul.f32 %v1079, %v896
        %v1149 = vmul.f32 %v1084, %v899
        %v1150 = vmul.f32 %v1089, %v904
        %v1151 = vmul.f32 %v1094, %v907
        %v1152 = vmul.f32 %v1099, %v912
        %v1153 = vmul.f32 %v1104, %v915
        %v1154 = vmul.f32 %v1109, %v920
        %v1155 = vmul.f32 %v1114, %v923
        %v1156 = vmul.f32 %v1119, %v928
        %v1157 = vmul.f32 %v1124, %v931
        %v1158 = vmax.f32 %v1126, 0.0
        %v1159 = vmax.f32 %v1127, 0.0
        %v1160 = vmax.f32 %v1128, 0.0
        %v1161 = vmax.f32 %v1129, 0.0
        %v1162 = vmax.f32 %v1130, 0.0
        %v1163 = vmax.f32 %v1131, 0.0
        %v1164 = vmax.f32 %v1132, 0.0
        %v1165 = vmax.f32 %v1133, 0.0
        %v1166 = vmax.f32 %v1134, 0.0
        %v1167 = vmax.f32 %v1135, 0.0
        %v1168 = vmax.f32 %v1136, 0.0
        %v1169 = vmax.f32 %v1137, 0.0
        %v1170 = vmax.f32 %v1138, 0.0
        %v1171 = vmax.f32 %v1139, 0.0
        %v1172 = vmax.f32 %v1140, 0.0
        %v1173 = vmax.f32 %v1141, 0.0
        %v1174 = vmax.f32 %v1142, 0.0
        %v1175 = vmax.f32 %v1143, 0.0
        %v1176 = vmax.f32 %v1144, 0.0
        %v1177 = vmax.f32 %v1145, 0.0
        %v1178 = vmax.f32 %v1146, 0.0
        %v1179 = vmax.f32 %v1147, 0.0
        %v1180 = vmax.f32 %v1148, 0.0
        %v1181 = vmax.f32 %v1149, 0.0
        %v1182 = vmax.f32 %v1150, 0.0
        %v1183 = vmax.f32 %v1151, 0.0
        %v1184 = vmax.f32 %v1152, 0.0
        %v1185 = vmax.f32 %v1153, 0.0
        %v1186 = vmax.f32 %v1154, 0.0
        %v1187 = vmax.f32 %v1155, 0.0
        %v1188 = vmax.f32 %v1156, 0.0
        %v1189 = vmax.f32 %v1157, 0.0
        %1190 = vst [vmem:[%s231] sm:$0xff] %v1158
        %1191 = vst [vmem:[%s231 + $0x8] sm:$0xff] %v1159
        %1192 = vst [vmem:[%s231 + $0x10] sm:$0xff] %v1160
        %1193 = vst [vmem:[%s231 + $0x18] sm:$0xff] %v1161
        %1194 = vst [vmem:[%s231 + $0x20] sm:$0xff] %v1162
        %1195 = vst [vmem:[%s231 + $0x28] sm:$0xff] %v1163
        %1196 = vst [vmem:[%s231 + $0x30] sm:$0xff] %v1164
        %1197 = vst [vmem:[%s231 + $0x38] sm:$0xff] %v1165
        %1198 = vst [vmem:[%s231 + $0x40] sm:$0xff] %v1166
        %1199 = vst [vmem:[%s231 + $0x48] sm:$0xff] %v1167
        %1200 = vst [vmem:[%s231 + $0x50] sm:$0xff] %v1168
        %1201 = vst [vmem:[%s231 + $0x58] sm:$0xff] %v1169
        %1202 = vst [vmem:[%s231 + $0x60] sm:$0xff] %v1170
        %1203 = vst [vmem:[%s231 + $0x68] sm:$0xff] %v1171
        %1204 = vst [vmem:[%s231 + $0x70] sm:$0xff] %v1172
        %1205 = vst [vmem:[%s231 + $0x78] sm:$0xff] %v1173
        %1206 = vst [vmem:[%s231 + $0x80] sm:$0xff] %v1174
        %1207 = vst [vmem:[%s231 + $0x88] sm:$0xff] %v1175
        %1208 = vst [vmem:[%s231 + $0x90] sm:$0xff] %v1176
        %1209 = vst [vmem:[%s231 + $0x98] sm:$0xff] %v1177
        %1210 = vst [vmem:[%s231 + $0xa0] sm:$0xff] %v1178
        %1211 = vst [vmem:[%s231 + $0xa8] sm:$0xff] %v1179
        %1212 = vst [vmem:[%s231 + $0xb0] sm:$0xff] %v1180
        %1213 = vst [vmem:[%s231 + $0xb8] sm:$0xff] %v1181
        %1214 = vst [vmem:[%s231 + $0xc0] sm:$0xff] %v1182
        %1215 = vst [vmem:[%s231 + $0xc8] sm:$0xff] %v1183
        %1216 = vst [vmem:[%s231 + $0xd0] sm:$0xff] %v1184
        %1217 = vst [vmem:[%s231 + $0xd8] sm:$0xff] %v1185
        %1218 = vst [vmem:[%s231 + $0xe0] sm:$0xff] %v1186
        %1219 = vst [vmem:[%s231 + $0xe8] sm:$0xff] %v1187
        %1220 = vst [vmem:[%s231 + $0xf0] sm:$0xff] %v1188
        %1221 = vst [vmem:[%s231 + $0xf8] sm:$0xff] %v1189
        %s1222 = sand.u32 %s121, 1
        %s1223 = scalar_lea.sflag [#allocation3], %s1222
        %s1224 = sand.u32 %s121, 1
        %s1225 = smul.addr %s1224, 256
        %s1226 = scalar_lea.vmem [#allocation2], %s1225
        // Predicated region
        $region33: #{gcn_encoder.3} parent=31 // pred_check
          %p1227 = pneg %p131
        $region34: #{gcn_encoder.3} parent=31 // pred_check_branch
          %1229 = sbr.rel (%p1227) target = $region36
        $region35: #{gcn_encoder.3} parent=31 // pred_region
          %s1230 = smul.u32 32, %s22
          %s1232 = ssub.s32 4096, 4096
          %1233 = vsyncadd %s1223, %s1232
          %s1234 = smul.addr %s21, 64
          %s1235 = sadd.s32 %s1230, %s1234
          %s1236 = smul.addr %s1235, 128
          %s1237 = scalar_lea.hbm %s3, %s1236
          %s1238 = sshll.u32 %s1226, 4
          %s1239 = int_to_ptr.vmem [resolvable:$true] %s1238
          %1244 = dma.vmem_to_hbm [thread:$0]  %s1239, 4096, %s1237, %s1223, 128, 128, 8
        $region36: #{gcn_encoder.3} parent=31 // pred_fallthru
          _
      $region32: #{gcn_encoder.3} parent=5 // pred_fallthru
        _
      %p1245 = scmp.le.s32.totalorder 2, %s12
      // Predicated region
      $region37: #{gcn_encoder.3} parent=5 // pred_check
        %p1246 = pneg %p1245
      $region38: #{gcn_encoder.3} parent=5 // pred_check_branch
        %1248 = sbr.rel (%p1246) target = $region40
      $region39: #{gcn_encoder.3} parent=5 // pred_region
        %s1249 = ssub.s32 %s12, 2
        // Predicated region
        $region41: #{gcn_encoder.3} parent=39 // pred_check
          %p1250 = pneg %p137
        $region42: #{gcn_encoder.3} parent=39 // pred_check_branch
          %1252 = sbr.rel (%p1250) target = $region44
        $region43: #{gcn_encoder.3} parent=39 // pred_region
          %s1253 = sand.u32 %s122, 1
          %s1254 = scalar_lea.sflag [#allocation3], %s1253
          %s1255 = sand.u32 %s122, 1
          %s1256 = smul.addr %s1255, 256
          %s1257 = scalar_lea.vmem [#allocation2], %s1256
          %1258 = dma.done %s1254, 4096
        $region44: #{gcn_encoder.3} parent=39 // pred_fallthru
          _
      $region40: #{gcn_encoder.3} parent=5 // pred_fallthru
        _
    $region6: #{gcn_encoder.3} parent=1 // loop_footer
      %s16 = sadd.s32 1, %s12
    $region7: #{gcn_encoder.3} parent=1 // loop_footer_branch
      %11 = sbr.rel target = $region3
    $region8: #{gcn_encoder.3} parent=1 // loop_exit
      _
    %1259 = vsyncpa [#allocation3], 1
    %s1260 = scalar_lea.sflag [#allocation3], 1
    %1261 = vsyncpa %s1260, 1

// kernel: gcn_encoder.2
$region0: #{gcn_encoder.2}
  #allocation0 [shape = 'u32[]', space=smem, size = 0x4, offset = 0x4, fixed_abs, tag = 'smem constant byte address 0x4 - core index']
  #allocation1 [shape = 'u32[144,128]{1,0:T(1,128)}', space=vmem, size = 0x12000, scoped, tag = 'internal scratch']
  %s0 = inlined_call_operand.vmem [shape: s8[2,512,512], index: 0, kind: input, shape index: {}]
  %s1 = inlined_call_operand.vmem [shape: f32[2,512,1], index: 1, kind: input, shape index: {}]
  %s2 = inlined_call_operand.vmem [shape: bf16[2,512,128], index: 2, kind: input, shape index: {}]
  %s3 = inlined_call_operand.vmem [shape: bf16[128,256], index: 3, kind: input, shape index: {}]
  %s4 = inlined_call_operand.vmem [shape: bf16[2,512,256], index: 4, kind: output, shape index: {}]
  %s5 = sld [smem:[#allocation0]]
  $region49: #{gcn_encoder.2} parent=0
    _
  %s7 = ssub.s32 1, %s5
  %s8 = scalar_select 0, %s7, %s5
  loop: start=0, step=1, limit=6
  $region2: #{gcn_encoder.2} parent=0 // loop_pre_header
    _
  $region3: #{gcn_encoder.2} parent=0 // loop_header
    %s10 = sphi 0, %s14
    %p11 = scmp.ge.s32.totalorder %s10, 6
    %s17 = sphi 0, %s29
    %s18 = sphi 0, %s25
    %s19 = sphi 0, %s17
    %s20 = sphi 0, %s18
    %s21 = sphi 0, %s19
    %s22 = sphi 0, %s20
    %s34 = sphi 0, %s36
    %s37 = sphi 0, %s34
    %s38 = sphi 0, %s37
    %s54 = sphi 0, %s38
    %s62 = sphi 0, %s64
    %s65 = sphi 0, %s62
    %s66 = sphi 0, %s65
    %s82 = sphi 0, %s66
    %s88 = sphi 0, %s90
    %s91 = sphi 0, %s88
    %s92 = sphi 0, %s91
    %s108 = sphi 0, %s92
    %s112 = sphi 0, %s112
    %s114 = sphi 0, %s112
    %s115 = sphi 0, %s114
    %s129 = sphi 0, %s115
    %s137 = sphi 0, %s139
    %s140 = sphi 0, %s137
    %s141 = sphi 0, %s140
    %s157 = sphi 0, %s141
  $region4: #{gcn_encoder.2} parent=0 // loop_header_branch
    %13 = sbr.rel (%p11) target = $region8
  $region5: #{gcn_encoder.2} parent=0 // loop_body
    %s15 = ssub.s32 %s10, 1
    %s16 = ssub.s32 %s10, 2
    %s23 = sadd.s32 1, %s18
    %p24 = scmp.ge.s32.totalorder %s23, 2
    %s25 = scalar_select %p24, 0, %s23
    %s26 = sadd.s32 1, %s17
    %s27 = scalar_select %p24, %s26, %s17
    %p28 = scmp.ge.s32.totalorder %s27, 2
    %s29 = scalar_select %p28, 0, %s27
    %s30 = ssub.s32 %s17, %s29
    %s31 = ssub.s32 %s18, %s25
    %s32 = sor.u32 %s30, %s31
    %p33 = scmp.eq.s32.totalorder %s32, 0
    %s35 = sadd.s32 %s34, 1
    %s36 = scalar_select %p33, %s34, %s35
    %p39 = pneg %p33
    %p40 = scmp.eq.s32.totalorder %s10, 3
    %p41 = por %p39, %p40
    %p42 = scmp.ne.s32.totalorder %s34, %s37
    %p43 = scmp.eq.s32.totalorder %s10, 0
    %p44 = por %p42, %p43
    %p45 = scmp.ne.s32.totalorder %s34, %s37
    %p46 = scmp.eq.s32.totalorder %s15, 3
    %p47 = por %p45, %p46
    %p48 = scmp.ne.s32.totalorder %s37, %s38
    %p49 = scmp.eq.s32.totalorder %s15, 0
    %p50 = por %p48, %p49
    %p51 = scmp.ne.s32.totalorder %s37, %s38
    %p52 = scmp.eq.s32.totalorder %s16, 3
    %p53 = por %p51, %p52
    %p55 = scmp.ne.s32.totalorder %s38, %s54
    %p56 = scmp.eq.s32.totalorder %s16, 0
    %p57 = por %p55, %p56
    %s58 = ssub.s32 %s17, %s29
    %s59 = ssub.s32 %s18, %s25
    %s60 = sor.u32 %s58, %s59
    %p61 = scmp.eq.s32.totalorder %s60, 0
    %s63 = sadd.s32 %s62, 1
    %s64 = scalar_select %p61, %s62, %s63
    %p67 = pneg %p61
    %p68 = scmp.eq.s32.totalorder %s10, 3
    %p69 = por %p67, %p68
    %p70 = scmp.ne.s32.totalorder %s62, %s65
    %p71 = scmp.eq.s32.totalorder %s10, 0
    %p72 = por %p70, %p71
    %p73 = scmp.ne.s32.totalorder %s62, %s65
    %p74 = scmp.eq.s32.totalorder %s15, 3
    %p75 = por %p73, %p74
    %p76 = scmp.ne.s32.totalorder %s65, %s66
    %p77 = scmp.eq.s32.totalorder %s15, 0
    %p78 = por %p76, %p77
    %p79 = scmp.ne.s32.totalorder %s65, %s66
    %p80 = scmp.eq.s32.totalorder %s16, 3
    %p81 = por %p79, %p80
    %p83 = scmp.ne.s32.totalorder %s66, %s82
    %p84 = scmp.eq.s32.totalorder %s16, 0
    %p85 = por %p83, %p84
    %s86 = ssub.s32 %s17, %s29
    %p87 = scmp.eq.s32.totalorder %s86, 0
    %s89 = sadd.s32 %s88, 1
    %s90 = scalar_select %p87, %s88, %s89
    %p93 = pneg %p87
    %p94 = scmp.eq.s32.totalorder %s10, 3
    %p95 = por %p93, %p94
    %p96 = scmp.ne.s32.totalorder %s88, %s91
    %p97 = scmp.eq.s32.totalorder %s10, 0
    %p98 = por %p96, %p97
    %p99 = scmp.ne.s32.totalorder %s88, %s91
    %p100 = scmp.eq.s32.totalorder %s15, 3
    %p101 = por %p99, %p100
    %p102 = scmp.ne.s32.totalorder %s91, %s92
    %p103 = scmp.eq.s32.totalorder %s15, 0
    %p104 = por %p102, %p103
    %p105 = scmp.ne.s32.totalorder %s91, %s92
    %p106 = scmp.eq.s32.totalorder %s16, 3
    %p107 = por %p105, %p106
    %p109 = scmp.ne.s32.totalorder %s92, %s108
    %p110 = scmp.eq.s32.totalorder %s16, 0
    %p111 = por %p109, %p110
    %s113 = sadd.s32 %s112, 1
    %p116 = scmp.eq.s32.totalorder %s10, 3
    %p117 = scmp.ne.s32.totalorder %s112, %s114
    %p118 = scmp.eq.s32.totalorder %s10, 0
    %p119 = por %p117, %p118
    %p120 = scmp.ne.s32.totalorder %s112, %s114
    %p121 = scmp.eq.s32.totalorder %s15, 3
    %p122 = por %p120, %p121
    %p123 = scmp.ne.s32.totalorder %s114, %s115
    %p124 = scmp.eq.s32.totalorder %s15, 0
    %p125 = por %p123, %p124
    %p126 = scmp.ne.s32.totalorder %s114, %s115
    %p127 = scmp.eq.s32.totalorder %s16, 3
    %p128 = por %p126, %p127
    %p130 = scmp.ne.s32.totalorder %s115, %s129
    %p131 = scmp.eq.s32.totalorder %s16, 0
    %p132 = por %p130, %p131
    %s133 = ssub.s32 %s17, %s29
    %s134 = ssub.s32 %s18, %s25
    %s135 = sor.u32 %s133, %s134
    %p136 = scmp.eq.s32.totalorder %s135, 0
    %s138 = sadd.s32 %s137, 1
    %s139 = scalar_select %p136, %s137, %s138
    %p142 = pneg %p136
    %p143 = scmp.eq.s32.totalorder %s10, 3
    %p144 = por %p142, %p143
    %p145 = scmp.ne.s32.totalorder %s137, %s140
    %p146 = scmp.eq.s32.totalorder %s10, 0
    %p147 = por %p145, %p146
    %p148 = scmp.ne.s32.totalorder %s137, %s140
    %p149 = scmp.eq.s32.totalorder %s15, 3
    %p150 = por %p148, %p149
    %p151 = scmp.ne.s32.totalorder %s140, %s141
    %p152 = scmp.eq.s32.totalorder %s15, 0
    %p153 = por %p151, %p152
    %p154 = scmp.ne.s32.totalorder %s140, %s141
    %p155 = scmp.eq.s32.totalorder %s16, 3
    %p156 = por %p154, %p155
    %p158 = scmp.ne.s32.totalorder %s141, %s157
    %p159 = scmp.eq.s32.totalorder %s16, 0
    %p160 = por %p158, %p159
    %p161 = scmp.le.s32.totalorder 1, %s10
    %p162 = scmp.lt.s32.totalorder %s10, 5
    %p163 = pnand %p161, %p162
    %p164 = pneg %p163
    // Predicated region
    $region9: #{gcn_encoder.2} parent=5 // pred_check
      _
    $region10: #{gcn_encoder.2} parent=5 // pred_check_branch
      %166 = sbr.rel (%p163) target = $region12
    $region11: #{gcn_encoder.2} parent=5 // pred_region
      %s167 = ssub.s32 %s10, 1
      // Predicated region
      $region13: #{gcn_encoder.2} parent=11 // pred_check
        %p168 = pneg %p125
      $region14: #{gcn_encoder.2} parent=11 // pred_check_branch
        %170 = sbr.rel (%p168) target = $region16
      $region15: #{gcn_encoder.2} parent=11 // pred_region
        _
      $region16: #{gcn_encoder.2} parent=11 // pred_fallthru
        _
    $region12: #{gcn_encoder.2} parent=5 // pred_fallthru
      _
    %p171 = scmp.lt.s32.totalorder %s10, 4
    // Predicated region
    $region17: #{gcn_encoder.2} parent=5 // pred_check
      %p172 = pneg %p171
    $region18: #{gcn_encoder.2} parent=5 // pred_check_branch
      %174 = sbr.rel (%p172) target = $region20
    $region19: #{gcn_encoder.2} parent=5 // pred_region
      // Predicated region
      $region21: #{gcn_encoder.2} parent=19 // pred_check
        %p175 = pneg %p44
      $region22: #{gcn_encoder.2} parent=19 // pred_check_branch
        %177 = sbr.rel (%p175) target = $region24
      $region23: #{gcn_encoder.2} parent=19 // pred_region
        %s178 = smul.u32 8, %s18
        %p179 = scmp.lt.s32.totalorder %s17, 1
        %s180 = scalar_select %p179, %s17, 1
        %p181 = scmp.lt.s32.totalorder %s178, 15
        %s182 = scalar_select %p181, %s178, 15
        %s183 = smul.addr %s182, 4
        %s184 = smul.addr %s180, 64
        %s185 = sadd.s32 %s183, %s184
        %s186 = smul.addr %s185, 8
        %s187 = scalar_lea.vmem %s0, %s186
        %s188 = smul.u32 8, %s18
      $region24: #{gcn_encoder.2} parent=19 // pred_fallthru
        _
      // Predicated region
      $region25: #{gcn_encoder.2} parent=19 // pred_check
        %p189 = pneg %p72
      $region26: #{gcn_encoder.2} parent=19 // pred_check_branch
        %191 = sbr.rel (%p189) target = $region28
      $region27: #{gcn_encoder.2} parent=19 // pred_region
        %s192 = smul.u32 32, %s18
        %p193 = scmp.lt.s32.totalorder %s17, 1
        %s194 = scalar_select %p193, %s17, 1
        %p195 = scmp.lt.s32.totalorder %s192, 63
        %s196 = scalar_select %p195, %s192, 63
        %s197 = smul.addr %s194, 64
        %s198 = sadd.s32 %s196, %s197
        %s199 = smul.addr %s198, 8
        %s200 = scalar_lea.vmem %s1, %s199
        %s201 = smul.u32 32, %s18
      $region28: #{gcn_encoder.2} parent=19 // pred_fallthru
        _
      // Predicated region
      $region29: #{gcn_encoder.2} parent=19 // pred_check
        %p202 = pneg %p98
      $region30: #{gcn_encoder.2} parent=19 // pred_check_branch
        %204 = sbr.rel (%p202) target = $region32
      $region31: #{gcn_encoder.2} parent=19 // pred_region
        %p205 = scmp.lt.s32.totalorder %s17, 1
        %s206 = scalar_select %p205, %s17, 1
        %s207 = smul.addr %s206, 64
        %s208 = smul.addr %s207, 4
        %s209 = scalar_lea.vmem %s2, %s208
      $region32: #{gcn_encoder.2} parent=19 // pred_fallthru
        _
    $region20: #{gcn_encoder.2} parent=5 // pred_fallthru
      _
    %p210 = scmp.le.s32.totalorder 1, %s10
    %p211 = scmp.lt.s32.totalorder %s10, 5
    %p212 = pnand %p210, %p211
    %p213 = pneg %p212
    // Predicated region
    $region33: #{gcn_encoder.2} parent=5 // pred_check
      _
    $region34: #{gcn_encoder.2} parent=5 // pred_check_branch
      %215 = sbr.rel (%p212) target = $region36
    $region35: #{gcn_encoder.2} parent=5 // pred_region
      %s216 = ssub.s32 %s10, 1
      %s217 = smul.u32 8, %s20
      %p218 = scmp.lt.s32.totalorder %s19, 1
      %s219 = scalar_select %p218, %s19, 1
      %p220 = scmp.lt.s32.totalorder %s217, 15
      %s221 = scalar_select %p220, %s217, 15
      %s222 = smul.addr %s221, 4
      %s223 = smul.addr %s219, 64
      %s224 = sadd.s32 %s222, %s223
      %s225 = smul.addr %s224, 8
      %s226 = scalar_lea.vmem %s0, %s225
      %p227 = pneg %p50
      %p228 = pneg %p47
      %s229 = smul.u32 32, %s20
      %p230 = scmp.lt.s32.totalorder %s19, 1
      %s231 = scalar_select %p230, %s19, 1
      %p232 = scmp.lt.s32.totalorder %s229, 63
      %s233 = scalar_select %p232, %s229, 63
      %s234 = smul.addr %s231, 64
      %s235 = sadd.s32 %s233, %s234
      %s236 = smul.addr %s235, 8
      %s237 = scalar_lea.vmem %s1, %s236
      %p238 = pneg %p78
      %p239 = pneg %p75
      %p240 = scmp.lt.s32.totalorder %s19, 1
      %s241 = scalar_select %p240, %s19, 1
      %s242 = smul.addr %s241, 64
      %s243 = smul.addr %s242, 4
      %s244 = scalar_lea.vmem %s2, %s243
      %p245 = pneg %p104
      %p246 = pneg %p101
      %p247 = pneg %p125
      %p248 = pneg %p122
      %p249 = pneg %p153
      %p250 = pneg %p150
      %s251 = smul.u32 16, %s20
      %p252 = scmp.lt.s32.totalorder %s19, 1
      %s253 = scalar_select %p252, %s19, 1
      %p254 = scmp.lt.s32.totalorder %s251, 31
      %s255 = scalar_select %p254, %s251, 31
      %s256 = smul.addr %s255, 2
      %s257 = smul.addr %s253, 64
      %s258 = sadd.s32 %s256, %s257
      %s259 = smul.addr %s258, 8
      %s260 = scalar_lea.vmem %s4, %s259
      %s261 = smul.u32 8, %s20
      %p262 = scmp.lt.s32.totalorder %s19, 1
      %s263 = scalar_select %p262, %s19, 1
      %p264 = scmp.lt.s32.totalorder %s261, 15
      %s265 = scalar_select %p264, %s261, 15
      %s266 = smul.addr %s265, 4
      %s267 = smul.addr %s263, 64
      %s268 = sadd.s32 %s266, %s267
      %s269 = smul.addr %s268, 8
      %s270 = scalar_lea.vmem %s0, %s269
      %s271 = smul.u32 8, %s20
      %s272 = smul.u32 32, %s20
      %p273 = scmp.lt.s32.totalorder %s19, 1
      %s274 = scalar_select %p273, %s19, 1
      %p275 = scmp.lt.s32.totalorder %s272, 63
      %s276 = scalar_select %p275, %s272, 63
      %s277 = smul.addr %s274, 64
      %s278 = sadd.s32 %s276, %s277
      %s279 = smul.addr %s278, 8
      %s280 = scalar_lea.vmem %s1, %s279
      %s281 = smul.u32 32, %s20
      %p282 = scmp.lt.s32.totalorder %s19, 1
      %s283 = scalar_select %p282, %s19, 1
      %s284 = smul.addr %s283, 64
      %s285 = smul.addr %s284, 4
      %s286 = scalar_lea.vmem %s2, %s285
      %s287 = smul.u32 16, %s20
      %p288 = scmp.lt.s32.totalorder %s19, 1
      %s289 = scalar_select %p288, %s19, 1
      %p290 = scmp.lt.s32.totalorder %s287, 31
      %s291 = scalar_select %p290, %s287, 31
      %s292 = smul.addr %s291, 2
      %s293 = smul.addr %s289, 64
      %s294 = sadd.s32 %s292, %s293
      %s295 = smul.addr %s294, 8
      %s296 = scalar_lea.vmem %s4, %s295
      %s297 = smul.u32 16, %s20
      %v299 = vld [vmem:[%s270] sm:$0xff]
      %v300 = vld [vmem:[%s270 + $0x8] sm:$0xff]
      %v301 = vld [vmem:[%s270 + $0x10] sm:$0xff]
      %v302 = vld [vmem:[%s270 + $0x18] sm:$0xff]
      %v303 = vld [vmem:[%s270 + $0x20] sm:$0xff]
      %v304 = vld [vmem:[%s270 + $0x28] sm:$0xff]
      %v305 = vld [vmem:[%s270 + $0x30] sm:$0xff]
      %v306 = vld [vmem:[%s270 + $0x38] sm:$0xff]
      %v307 = vld [vmem:[%s270 + $0x40] sm:$0xff]
      %v308 = vld [vmem:[%s270 + $0x48] sm:$0xff]
      %v309 = vld [vmem:[%s270 + $0x50] sm:$0xff]
      %v310 = vld [vmem:[%s270 + $0x58] sm:$0xff]
      %v311 = vld [vmem:[%s270 + $0x60] sm:$0xff]
      %v312 = vld [vmem:[%s270 + $0x68] sm:$0xff]
      %v313 = vld [vmem:[%s270 + $0x70] sm:$0xff]
      %v314 = vld [vmem:[%s270 + $0x78] sm:$0xff]
      %v315 = vld [vmem:[%s270 + $0x80] sm:$0xff]
      %v316 = vld [vmem:[%s270 + $0x88] sm:$0xff]
      %v317 = vld [vmem:[%s270 + $0x90] sm:$0xff]
      %v318 = vld [vmem:[%s270 + $0x98] sm:$0xff]
      %v319 = vld [vmem:[%s270 + $0xa0] sm:$0xff]
      %v320 = vld [vmem:[%s270 + $0xa8] sm:$0xff]
      %v321 = vld [vmem:[%s270 + $0xb0] sm:$0xff]
      %v322 = vld [vmem:[%s270 + $0xb8] sm:$0xff]
      %v323 = vld [vmem:[%s270 + $0xc0] sm:$0xff]
      %v324 = vld [vmem:[%s270 + $0xc8] sm:$0xff]
      %v325 = vld [vmem:[%s270 + $0xd0] sm:$0xff]
      %v326 = vld [vmem:[%s270 + $0xd8] sm:$0xff]
      %v327 = vld [vmem:[%s270 + $0xe0] sm:$0xff]
      %v328 = vld [vmem:[%s270 + $0xe8] sm:$0xff]
      %v329 = vld [vmem:[%s270 + $0xf0] sm:$0xff]
      %v330 = vld [vmem:[%s270 + $0xf8] sm:$0xff]
      %v331 = vunpack.c.l.s8.bf16 %v299
      %v332 = vunpack.c.l.s8.bf16 %v300
      %v333 = vunpack.c.l.s8.bf16 %v301
      %v334 = vunpack.c.l.s8.bf16 %v302
      %v335 = vunpack.c.h.s8.bf16 %v299
      %v336 = vunpack.c.h.s8.bf16 %v300
      %v337 = vunpack.c.h.s8.bf16 %v301
      %v338 = vunpack.c.h.s8.bf16 %v302
      %v339 = vunpack.c.l.s8.bf16 %v303
      %v340 = vunpack.c.l.s8.bf16 %v304
      %v341 = vunpack.c.l.s8.bf16 %v305
      %v342 = vunpack.c.l.s8.bf16 %v306
      %v343 = vunpack.c.h.s8.bf16 %v303
      %v344 = vunpack.c.h.s8.bf16 %v304
      %v345 = vunpack.c.h.s8.bf16 %v305
      %v346 = vunpack.c.h.s8.bf16 %v306
      %v347 = vunpack.c.l.s8.bf16 %v307
      %v348 = vunpack.c.l.s8.bf16 %v308
      %v349 = vunpack.c.l.s8.bf16 %v309
      %v350 = vunpack.c.l.s8.bf16 %v310
      %v351 = vunpack.c.h.s8.bf16 %v307
      %v352 = vunpack.c.h.s8.bf16 %v308
      %v353 = vunpack.c.h.s8.bf16 %v309
      %v354 = vunpack.c.h.s8.bf16 %v310
      %v355 = vunpack.c.l.s8.bf16 %v311
      %v356 = vunpack.c.l.s8.bf16 %v312
      %v357 = vunpack.c.l.s8.bf16 %v313
      %v358 = vunpack.c.l.s8.bf16 %v314
      %v359 = vunpack.c.h.s8.bf16 %v311
      %v360 = vunpack.c.h.s8.bf16 %v312
      %v361 = vunpack.c.h.s8.bf16 %v313
      %v362 = vunpack.c.h.s8.bf16 %v314
      %v363 = vunpack.c.l.s8.bf16 %v315
      %v364 = vunpack.c.l.s8.bf16 %v316
      %v365 = vunpack.c.l.s8.bf16 %v317
      %v366 = vunpack.c.l.s8.bf16 %v318
      %v367 = vunpack.c.h.s8.bf16 %v315
      %v368 = vunpack.c.h.s8.bf16 %v316
      %v369 = vunpack.c.h.s8.bf16 %v317
      %v370 = vunpack.c.h.s8.bf16 %v318
      %v371 = vunpack.c.l.s8.bf16 %v319
      %v372 = vunpack.c.l.s8.bf16 %v320
      %v373 = vunpack.c.l.s8.bf16 %v321
      %v374 = vunpack.c.l.s8.bf16 %v322
      %v375 = vunpack.c.h.s8.bf16 %v319
      %v376 = vunpack.c.h.s8.bf16 %v320
      %v377 = vunpack.c.h.s8.bf16 %v321
      %v378 = vunpack.c.h.s8.bf16 %v322
      %v379 = vunpack.c.l.s8.bf16 %v323
      %v380 = vunpack.c.l.s8.bf16 %v324
      %v381 = vunpack.c.l.s8.bf16 %v325
      %v382 = vunpack.c.l.s8.bf16 %v326
      %v383 = vunpack.c.h.s8.bf16 %v323
      %v384 = vunpack.c.h.s8.bf16 %v324
      %v385 = vunpack.c.h.s8.bf16 %v325
      %v386 = vunpack.c.h.s8.bf16 %v326
      %v387 = vunpack.c.l.s8.bf16 %v327
      %v388 = vunpack.c.l.s8.bf16 %v328
      %v389 = vunpack.c.l.s8.bf16 %v329
      %v390 = vunpack.c.l.s8.bf16 %v330
      %v391 = vunpack.c.h.s8.bf16 %v327
      %v392 = vunpack.c.h.s8.bf16 %v328
      %v393 = vunpack.c.h.s8.bf16 %v329
      %v394 = vunpack.c.h.s8.bf16 %v330
      %v395 = vld [vmem:[%s286] sm:$0xf]
      %v396 = vld [vmem:[%s286 + $0x4] sm:$0xf]
      %v397 = vld [vmem:[%s286 + $0x8] sm:$0xf]
      %v398 = vld [vmem:[%s286 + $0xc] sm:$0xf]
      %v399 = vld [vmem:[%s286 + $0x10] sm:$0xf]
      %v400 = vld [vmem:[%s286 + $0x14] sm:$0xf]
      %v401 = vld [vmem:[%s286 + $0x18] sm:$0xf]
      %v402 = vld [vmem:[%s286 + $0x1c] sm:$0xf]
      %v403 = vld [vmem:[%s286 + $0x20] sm:$0xf]
      %v404 = vld [vmem:[%s286 + $0x24] sm:$0xf]
      %v405 = vld [vmem:[%s286 + $0x28] sm:$0xf]
      %v406 = vld [vmem:[%s286 + $0x2c] sm:$0xf]
      %v407 = vld [vmem:[%s286 + $0x30] sm:$0xf]
      %v408 = vld [vmem:[%s286 + $0x34] sm:$0xf]
      %v409 = vld [vmem:[%s286 + $0x38] sm:$0xf]
      %v410 = vld [vmem:[%s286 + $0x3c] sm:$0xf]
      %v411 = vld [vmem:[%s286 + $0x40] sm:$0xf]
      %v412 = vld [vmem:[%s286 + $0x44] sm:$0xf]
      %v413 = vld [vmem:[%s286 + $0x48] sm:$0xf]
      %v414 = vld [vmem:[%s286 + $0x4c] sm:$0xf]
      %v415 = vld [vmem:[%s286 + $0x50] sm:$0xf]
      %v416 = vld [vmem:[%s286 + $0x54] sm:$0xf]
      %v417 = vld [vmem:[%s286 + $0x58] sm:$0xf]
      %v418 = vld [vmem:[%s286 + $0x5c] sm:$0xf]
      %v419 = vld [vmem:[%s286 + $0x60] sm:$0xf]
      %v420 = vld [vmem:[%s286 + $0x64] sm:$0xf]
      %v421 = vld [vmem:[%s286 + $0x68] sm:$0xf]
      %v422 = vld [vmem:[%s286 + $0x6c] sm:$0xf]
      %v423 = vld [vmem:[%s286 + $0x70] sm:$0xf]
      %v424 = vld [vmem:[%s286 + $0x74] sm:$0xf]
      %v425 = vld [vmem:[%s286 + $0x78] sm:$0xf]
      %v426 = vld [vmem:[%s286 + $0x7c] sm:$0xf]
      %v427 = vld [vmem:[%s286 + $0x80] sm:$0xf]
      %v428 = vld [vmem:[%s286 + $0x84] sm:$0xf]
      %v429 = vld [vmem:[%s286 + $0x88] sm:$0xf]
      %v430 = vld [vmem:[%s286 + $0x8c] sm:$0xf]
      %v431 = vld [vmem:[%s286 + $0x90] sm:$0xf]
      %v432 = vld [vmem:[%s286 + $0x94] sm:$0xf]
      %v433 = vld [vmem:[%s286 + $0x98] sm:$0xf]
      %v434 = vld [vmem:[%s286 + $0x9c] sm:$0xf]
      %v435 = vld [vmem:[%s286 + $0xa0] sm:$0xf]
      %v436 = vld [vmem:[%s286 + $0xa4] sm:$0xf]
      %v437 = vld [vmem:[%s286 + $0xa8] sm:$0xf]
      %v438 = vld [vmem:[%s286 + $0xac] sm:$0xf]
      %v439 = vld [vmem:[%s286 + $0xb0] sm:$0xf]
      %v440 = vld [vmem:[%s286 + $0xb4] sm:$0xf]
      %v441 = vld [vmem:[%s286 + $0xb8] sm:$0xf]
      %v442 = vld [vmem:[%s286 + $0xbc] sm:$0xf]
      %v443 = vld [vmem:[%s286 + $0xc0] sm:$0xf]
      %v444 = vld [vmem:[%s286 + $0xc4] sm:$0xf]
      %v445 = vld [vmem:[%s286 + $0xc8] sm:$0xf]
      %v446 = vld [vmem:[%s286 + $0xcc] sm:$0xf]
      %v447 = vld [vmem:[%s286 + $0xd0] sm:$0xf]
      %v448 = vld [vmem:[%s286 + $0xd4] sm:$0xf]
      %v449 = vld [vmem:[%s286 + $0xd8] sm:$0xf]
      %v450 = vld [vmem:[%s286 + $0xdc] sm:$0xf]
      %v451 = vld [vmem:[%s286 + $0xe0] sm:$0xf]
      %v452 = vld [vmem:[%s286 + $0xe4] sm:$0xf]
      %v453 = vld [vmem:[%s286 + $0xe8] sm:$0xf]
      %v454 = vld [vmem:[%s286 + $0xec] sm:$0xf]
      %v455 = vld [vmem:[%s286 + $0xf0] sm:$0xf]
      %v456 = vld [vmem:[%s286 + $0xf4] sm:$0xf]
      %v457 = vld [vmem:[%s286 + $0xf8] sm:$0xf]
      %v458 = vld [vmem:[%s286 + $0xfc] sm:$0xf]
      %v523 = vunpack.c.l.b16 %v395
      %v524 = vunpack.c.l.b16 %v396
      %v525 = vunpack.c.l.b16 %v397
      %v526 = vunpack.c.l.b16 %v398
      %v527 = vunpack.c.l.b16 %v399
      %v528 = vunpack.c.l.b16 %v400
      %v529 = vunpack.c.l.b16 %v401
      %v530 = vunpack.c.l.b16 %v402
      %v531 = vunpack.c.l.b16 %v403
      %v532 = vunpack.c.l.b16 %v404
      %v533 = vunpack.c.l.b16 %v405
      %v534 = vunpack.c.l.b16 %v406
      %v535 = vunpack.c.l.b16 %v407
      %v536 = vunpack.c.l.b16 %v408
      %v537 = vunpack.c.l.b16 %v409
      %v538 = vunpack.c.l.b16 %v410
      %v539 = vunpack.c.l.b16 %v411
      %v540 = vunpack.c.l.b16 %v412
      %v541 = vunpack.c.l.b16 %v413
      %v542 = vunpack.c.l.b16 %v414
      %v543 = vunpack.c.l.b16 %v415
      %v544 = vunpack.c.l.b16 %v416
      %v545 = vunpack.c.l.b16 %v417
      %v546 = vunpack.c.l.b16 %v418
      %v547 = vunpack.c.l.b16 %v419
      %v548 = vunpack.c.l.b16 %v420
      %v549 = vunpack.c.l.b16 %v421
      %v550 = vunpack.c.l.b16 %v422
      %v551 = vunpack.c.l.b16 %v423
      %v552 = vunpack.c.l.b16 %v424
      %v553 = vunpack.c.l.b16 %v425
      %v554 = vunpack.c.l.b16 %v426
      %v555 = vunpack.c.l.b16 %v427
      %v556 = vunpack.c.l.b16 %v428
      %v557 = vunpack.c.l.b16 %v429
      %v558 = vunpack.c.l.b16 %v430
      %v559 = vunpack.c.l.b16 %v431
      %v560 = vunpack.c.l.b16 %v432
      %v561 = vunpack.c.l.b16 %v433
      %v562 = vunpack.c.l.b16 %v434
      %v563 = vunpack.c.l.b16 %v435
      %v564 = vunpack.c.l.b16 %v436
      %v565 = vunpack.c.l.b16 %v437
      %v566 = vunpack.c.l.b16 %v438
      %v567 = vunpack.c.l.b16 %v439
      %v568 = vunpack.c.l.b16 %v440
      %v569 = vunpack.c.l.b16 %v441
      %v570 = vunpack.c.l.b16 %v442
      %v571 = vunpack.c.l.b16 %v443
      %v572 = vunpack.c.l.b16 %v444
      %v573 = vunpack.c.l.b16 %v445
      %v574 = vunpack.c.l.b16 %v446
      %v575 = vunpack.c.l.b16 %v447
      %v576 = vunpack.c.l.b16 %v448
      %v577 = vunpack.c.l.b16 %v449
      %v578 = vunpack.c.l.b16 %v450
      %v579 = vunpack.c.l.b16 %v451
      %v580 = vunpack.c.l.b16 %v452
      %v581 = vunpack.c.l.b16 %v453
      %v582 = vunpack.c.l.b16 %v454
      %v583 = vunpack.c.l.b16 %v455
      %v584 = vunpack.c.l.b16 %v456
      %v585 = vunpack.c.l.b16 %v457
      %v586 = vunpack.c.l.b16 %v458
      %v587 = vpack.c.b16 %v524, %v523
      %v588 = vpack.c.b16 %v526, %v525
      %v589 = vpack.c.b16 %v528, %v527
      %v590 = vpack.c.b16 %v530, %v529
      %v591 = vpack.c.b16 %v532, %v531
      %v592 = vpack.c.b16 %v534, %v533
      %v593 = vpack.c.b16 %v536, %v535
      %v594 = vpack.c.b16 %v538, %v537
      %v595 = vpack.c.b16 %v540, %v539
      %v596 = vpack.c.b16 %v542, %v541
      %v597 = vpack.c.b16 %v544, %v543
      %v598 = vpack.c.b16 %v546, %v545
      %v599 = vpack.c.b16 %v548, %v547
      %v600 = vpack.c.b16 %v550, %v549
      %v601 = vpack.c.b16 %v552, %v551
      %v602 = vpack.c.b16 %v554, %v553
      %v603 = vpack.c.b16 %v556, %v555
      %v604 = vpack.c.b16 %v558, %v557
      %v605 = vpack.c.b16 %v560, %v559
      %v606 = vpack.c.b16 %v562, %v561
      %v607 = vpack.c.b16 %v564, %v563
      %v608 = vpack.c.b16 %v566, %v565
      %v609 = vpack.c.b16 %v568, %v567
      %v610 = vpack.c.b16 %v570, %v569
      %v611 = vpack.c.b16 %v572, %v571
      %v612 = vpack.c.b16 %v574, %v573
      %v613 = vpack.c.b16 %v576, %v575
      %v614 = vpack.c.b16 %v578, %v577
      %v615 = vpack.c.b16 %v580, %v579
      %v616 = vpack.c.b16 %v582, %v581
      %v617 = vpack.c.b16 %v584, %v583
      %v618 = vpack.c.b16 %v586, %v585
      %651 = vmatprep.subr.bf16.mxu0 0
      %652 = vmatpush1.bf16.msra.mxu0 %v587
      %653 = vmatprep.subr.bf16.mxu0 0
      %654 = vmatpush1.bf16.msra.mxu0 %v588
      %655 = vmatprep.subr.bf16.mxu0 0
      %656 = vmatpush1.bf16.msra.mxu0 %v589
      %657 = vmatprep.subr.bf16.mxu0 0
      %658 = vmatpush1.bf16.msra.mxu0 %v590
      %659 = vmatprep.subr.bf16.mxu0 0
      %660 = vmatpush1.bf16.msra.mxu0 %v591
      %661 = vmatprep.subr.bf16.mxu0 0
      %662 = vmatpush1.bf16.msra.mxu0 %v592
      %663 = vmatprep.subr.bf16.mxu0 0
      %664 = vmatpush1.bf16.msra.mxu0 %v593
      %665 = vmatprep.subr.bf16.mxu0 0
      %666 = vmatpush1.bf16.msra.mxu0 %v594
      %667 = vmatprep.subr.bf16.mxu0 0
      %668 = vmatpush1.bf16.msra.mxu0 %v595
      %669 = vmatprep.subr.bf16.mxu0 0
      %670 = vmatpush1.bf16.msra.mxu0 %v596
      %671 = vmatprep.subr.bf16.mxu0 0
      %672 = vmatpush1.bf16.msra.mxu0 %v597
      %673 = vmatprep.subr.bf16.mxu0 0
      %674 = vmatpush1.bf16.msra.mxu0 %v598
      %675 = vmatprep.subr.bf16.mxu0 0
      %676 = vmatpush1.bf16.msra.mxu0 %v599
      %677 = vmatprep.subr.bf16.mxu0 0
      %678 = vmatpush1.bf16.msra.mxu0 %v600
      %679 = vmatprep.subr.bf16.mxu0 0
      %680 = vmatpush1.bf16.msra.mxu0 %v601
      %681 = vmatprep.subr.bf16.mxu0 0
      %682 = vmatpush1.bf16.msra.mxu0 %v602
      %683 = vmatprep.mubr.bf16.mxu0 %v332
      %684 = vmatmul.mubr.bf16.gmra.mrb[0].mxu0 %v331
      %v685 = vpop.f32.mrb[0].mxu0
      %v686 = vadd.f32 0.0, %v685
      %v687 = vpop.f32.mrb[0].mxu0
      %v688 = vpop.f32.mrb[0].mxu0
      %v689 = vadd.f32 0.0, %v688
      %v690 = vpop.f32.mrb[0].mxu0
      %691 = vmatprep.mubr.bf16.mxu0 %v336
      %692 = vmatmul.mubr.bf16.gmra.mrb[0].mxu0 %v335
      %v693 = vpop.f32.mrb[0].mxu0
      %v694 = vadd.f32 0.0, %v693
      %v695 = vpop.f32.mrb[0].mxu0
      %v696 = vpop.f32.mrb[0].mxu0
      %v697 = vadd.f32 0.0, %v696
      %v698 = vpop.f32.mrb[0].mxu0
      %699 = vmatprep.mubr.bf16.mxu0 %v340
      %700 = vmatmul.mubr.bf16.gmra.mrb[0].mxu0 %v339
      %v701 = vpop.f32.mrb[0].mxu0
      %v702 = vadd.f32 0.0, %v701
      %v703 = vpop.f32.mrb[0].mxu0
      %v704 = vpop.f32.mrb[0].mxu0
      %v705 = vadd.f32 0.0, %v704
      %v706 = vpop.f32.mrb[0].mxu0
      %707 = vmatprep.mubr.bf16.mxu0 %v344
      %708 = vmatmul.mubr.bf16.gmra.mrb[0].mxu0 %v343
      %v709 = vpop.f32.mrb[0].mxu0
      %v710 = vadd.f32 0.0, %v709
      %v711 = vpop.f32.mrb[0].mxu0
      %v712 = vpop.f32.mrb[0].mxu0
      %v713 = vadd.f32 0.0, %v712
      %v714 = vpop.f32.mrb[0].mxu0
      %715 = vmatprep.mubr.bf16.mxu0 %v348
      %716 = vmatmul.mubr.bf16.gmra.mrb[0].mxu0 %v347
      %v717 = vpop.f32.mrb[0].mxu0
      %v718 = vadd.f32 0.0, %v717
      %v719 = vpop.f32.mrb[0].mxu0
      %v720 = vpop.f32.mrb[0].mxu0
      %v721 = vadd.f32 0.0, %v720
      %v722 = vpop.f32.mrb[0].mxu0
      %723 = vmatprep.mubr.bf16.mxu0 %v352
      %724 = vmatmul.mubr.bf16.gmra.mrb[0].mxu0 %v351
      %v725 = vpop.f32.mrb[0].mxu0
      %v726 = vadd.f32 0.0, %v725
      %v727 = vpop.f32.mrb[0].mxu0
      %v728 = vpop.f32.mrb[0].mxu0
      %v729 = vadd.f32 0.0, %v728
      %v730 = vpop.f32.mrb[0].mxu0
      %731 = vmatprep.mubr.bf16.mxu0 %v356
      %732 = vmatmul.mubr.bf16.gmra.mrb[0].mxu0 %v355
      %v733 = vpop.f32.mrb[0].mxu0
      %v734 = vadd.f32 0.0, %v733
      %v735 = vpop.f32.mrb[0].mxu0
      %v736 = vpop.f32.mrb[0].mxu0
      %v737 = vadd.f32 0.0, %v736
      %v738 = vpop.f32.mrb[0].mxu0
      %739 = vmatprep.mubr.bf16.mxu0 %v360
      %740 = vmatmul.mubr.bf16.gmra.mrb[0].mxu0 %v359
      %v741 = vpop.f32.mrb[0].mxu0
      %v742 = vadd.f32 0.0, %v741
      %v743 = vpop.f32.mrb[0].mxu0
      %v744 = vpop.f32.mrb[0].mxu0
      %v745 = vadd.f32 0.0, %v744
      %v746 = vpop.f32.mrb[0].mxu0
      %747 = vmatprep.mubr.bf16.mxu0 %v364
      %748 = vmatmul.mubr.bf16.gmra.mrb[0].mxu0 %v363
      %v749 = vpop.f32.mrb[0].mxu0
      %v750 = vadd.f32 0.0, %v749
      %v751 = vpop.f32.mrb[0].mxu0
      %v752 = vpop.f32.mrb[0].mxu0
      %v753 = vadd.f32 0.0, %v752
      %v754 = vpop.f32.mrb[0].mxu0
      %755 = vmatprep.mubr.bf16.mxu0 %v368
      %756 = vmatmul.mubr.bf16.gmra.mrb[0].mxu0 %v367
      %v757 = vpop.f32.mrb[0].mxu0
      %v758 = vadd.f32 0.0, %v757
      %v759 = vpop.f32.mrb[0].mxu0
      %v760 = vpop.f32.mrb[0].mxu0
      %v761 = vadd.f32 0.0, %v760
      %v762 = vpop.f32.mrb[0].mxu0
      %763 = vmatprep.mubr.bf16.mxu0 %v372
      %764 = vmatmul.mubr.bf16.gmra.mrb[0].mxu0 %v371
      %v765 = vpop.f32.mrb[0].mxu0
      %v766 = vadd.f32 0.0, %v765
      %v767 = vpop.f32.mrb[0].mxu0
      %v768 = vpop.f32.mrb[0].mxu0
      %v769 = vadd.f32 0.0, %v768
      %v770 = vpop.f32.mrb[0].mxu0
      %771 = vmatprep.mubr.bf16.mxu0 %v376
      %772 = vmatmul.mubr.bf16.gmra.mrb[0].mxu0 %v375
      %v773 = vpop.f32.mrb[0].mxu0
      %v774 = vadd.f32 0.0, %v773
      %v775 = vpop.f32.mrb[0].mxu0
      %v776 = vpop.f32.mrb[0].mxu0
      %v777 = vadd.f32 0.0, %v776
      %v778 = vpop.f32.mrb[0].mxu0
      %779 = vmatprep.mubr.bf16.mxu0 %v380
      %780 = vmatmul.mubr.bf16.gmra.mrb[0].mxu0 %v379
      %v781 = vpop.f32.mrb[0].mxu0
      %v782 = vadd.f32 0.0, %v781
      %v783 = vpop.f32.mrb[0].mxu0
      %v784 = vpop.f32.mrb[0].mxu0
      %v785 = vadd.f32 0.0, %v784
      %v786 = vpop.f32.mrb[0].mxu0
      %787 = vmatprep.mubr.bf16.mxu0 %v384
      %788 = vmatmul.mubr.bf16.gmra.mrb[0].mxu0 %v383
      %v789 = vpop.f32.mrb[0].mxu0
      %v790 = vadd.f32 0.0, %v789
      %v791 = vpop.f32.mrb[0].mxu0
      %v792 = vpop.f32.mrb[0].mxu0
      %v793 = vadd.f32 0.0, %v792
      %v794 = vpop.f32.mrb[0].mxu0
      %795 = vmatprep.mubr.bf16.mxu0 %v388
      %796 = vmatmul.mubr.bf16.gmra.mrb[0].mxu0 %v387
      %v797 = vpop.f32.mrb[0].mxu0
      %v798 = vadd.f32 0.0, %v797
      %v799 = vpop.f32.mrb[0].mxu0
      %v800 = vpop.f32.mrb[0].mxu0
      %v801 = vadd.f32 0.0, %v800
      %v802 = vpop.f32.mrb[0].mxu0
      %803 = vmatprep.mubr.bf16.mxu0 %v392
      %804 = vmatmul.mubr.bf16.gmra.mrb[0].mxu0 %v391
      %v805 = vpop.f32.mrb[0].mxu0
      %v806 = vadd.f32 0.0, %v805
      %v807 = vpop.f32.mrb[0].mxu0
      %v808 = vpop.f32.mrb[0].mxu0
      %v809 = vadd.f32 0.0, %v808
      %v810 = vpop.f32.mrb[0].mxu0
      %811 = vdwg.mxu0
      %812 = vmatprep.subr.bf16.mxu0 0
      %813 = vmatpush1.bf16.msra.mxu0 %v603
      %814 = vmatprep.subr.bf16.mxu0 0
      %815 = vmatpush1.bf16.msra.mxu0 %v604
      %816 = vmatprep.subr.bf16.mxu0 0
      %817 = vmatpush1.bf16.msra.mxu0 %v605
      %818 = vmatprep.subr.bf16.mxu0 0
      %819 = vmatpush1.bf16.msra.mxu0 %v606
      %820 = vmatprep.subr.bf16.mxu0 0
      %821 = vmatpush1.bf16.msra.mxu0 %v607
      %822 = vmatprep.subr.bf16.mxu0 0
      %823 = vmatpush1.bf16.msra.mxu0 %v608
      %824 = vmatprep.subr.bf16.mxu0 0
      %825 = vmatpush1.bf16.msra.mxu0 %v609
      %826 = vmatprep.subr.bf16.mxu0 0
      %827 = vmatpush1.bf16.msra.mxu0 %v610
      %828 = vmatprep.subr.bf16.mxu0 0
      %829 = vmatpush1.bf16.msra.mxu0 %v611
      %830 = vmatprep.subr.bf16.mxu0 0
      %831 = vmatpush1.bf16.msra.mxu0 %v612
      %832 = vmatprep.subr.bf16.mxu0 0
      %833 = vmatpush1.bf16.msra.mxu0 %v613
      %834 = vmatprep.subr.bf16.mxu0 0
      %835 = vmatpush1.bf16.msra.mxu0 %v614
      %836 = vmatprep.subr.bf16.mxu0 0
      %837 = vmatpush1.bf16.msra.mxu0 %v615
      %838 = vmatprep.subr.bf16.mxu0 0
      %839 = vmatpush1.bf16.msra.mxu0 %v616
      %840 = vmatprep.subr.bf16.mxu0 0
      %841 = vmatpush1.bf16.msra.mxu0 %v617
      %842 = vmatprep.subr.bf16.mxu0 0
      %843 = vmatpush1.bf16.msra.mxu0 %v618
      %844 = vmatprep.mubr.bf16.mxu0 %v334
      %845 = vmatmul.mubr.bf16.gmra.mrb[0].mxu0 %v333
      %v846 = vpop.f32.mrb[0].mxu0
      %v847 = vadd.f32 %v686, %v846
      %v848 = vpop.f32.mrb[0].mxu0
      %v849 = vpop.f32.mrb[0].mxu0
      %v850 = vadd.f32 %v689, %v849
      %v851 = vpop.f32.mrb[0].mxu0
      %852 = vmatprep.mubr.bf16.mxu0 %v338
      %853 = vmatmul.mubr.bf16.gmra.mrb[0].mxu0 %v337
      %v854 = vpop.f32.mrb[0].mxu0
      %v855 = vadd.f32 %v694, %v854
      %v856 = vpop.f32.mrb[0].mxu0
      %v857 = vpop.f32.mrb[0].mxu0
      %v858 = vadd.f32 %v697, %v857
      %v859 = vpop.f32.mrb[0].mxu0
      %860 = vmatprep.mubr.bf16.mxu0 %v342
      %861 = vmatmul.mubr.bf16.gmra.mrb[0].mxu0 %v341
      %v862 = vpop.f32.mrb[0].mxu0
      %v863 = vadd.f32 %v702, %v862
      %v864 = vpop.f32.mrb[0].mxu0
      %v865 = vpop.f32.mrb[0].mxu0
      %v866 = vadd.f32 %v705, %v865
      %v867 = vpop.f32.mrb[0].mxu0
      %868 = vmatprep.mubr.bf16.mxu0 %v346
      %869 = vmatmul.mubr.bf16.gmra.mrb[0].mxu0 %v345
      %v870 = vpop.f32.mrb[0].mxu0
      %v871 = vadd.f32 %v710, %v870
      %v872 = vpop.f32.mrb[0].mxu0
      %v873 = vpop.f32.mrb[0].mxu0
      %v874 = vadd.f32 %v713, %v873
      %v875 = vpop.f32.mrb[0].mxu0
      %876 = vmatprep.mubr.bf16.mxu0 %v350
      %877 = vmatmul.mubr.bf16.gmra.mrb[0].mxu0 %v349
      %v878 = vpop.f32.mrb[0].mxu0
      %v879 = vadd.f32 %v718, %v878
      %v880 = vpop.f32.mrb[0].mxu0
      %v881 = vpop.f32.mrb[0].mxu0
      %v882 = vadd.f32 %v721, %v881
      %v883 = vpop.f32.mrb[0].mxu0
      %884 = vmatprep.mubr.bf16.mxu0 %v354
      %885 = vmatmul.mubr.bf16.gmra.mrb[0].mxu0 %v353
      %v886 = vpop.f32.mrb[0].mxu0
      %v887 = vadd.f32 %v726, %v886
      %v888 = vpop.f32.mrb[0].mxu0
      %v889 = vpop.f32.mrb[0].mxu0
      %v890 = vadd.f32 %v729, %v889
      %v891 = vpop.f32.mrb[0].mxu0
      %892 = vmatprep.mubr.bf16.mxu0 %v358
      %893 = vmatmul.mubr.bf16.gmra.mrb[0].mxu0 %v357
      %v894 = vpop.f32.mrb[0].mxu0
      %v895 = vadd.f32 %v734, %v894
      %v896 = vpop.f32.mrb[0].mxu0
      %v897 = vpop.f32.mrb[0].mxu0
      %v898 = vadd.f32 %v737, %v897
      %v899 = vpop.f32.mrb[0].mxu0
      %900 = vmatprep.mubr.bf16.mxu0 %v362
      %901 = vmatmul.mubr.bf16.gmra.mrb[0].mxu0 %v361
      %v902 = vpop.f32.mrb[0].mxu0
      %v903 = vadd.f32 %v742, %v902
      %v904 = vpop.f32.mrb[0].mxu0
      %v905 = vpop.f32.mrb[0].mxu0
      %v906 = vadd.f32 %v745, %v905
      %v907 = vpop.f32.mrb[0].mxu0
      %908 = vmatprep.mubr.bf16.mxu0 %v366
      %909 = vmatmul.mubr.bf16.gmra.mrb[0].mxu0 %v365
      %v910 = vpop.f32.mrb[0].mxu0
      %v911 = vadd.f32 %v750, %v910
      %v912 = vpop.f32.mrb[0].mxu0
      %v913 = vpop.f32.mrb[0].mxu0
      %v914 = vadd.f32 %v753, %v913
      %v915 = vpop.f32.mrb[0].mxu0
      %916 = vmatprep.mubr.bf16.mxu0 %v370
      %917 = vmatmul.mubr.bf16.gmra.mrb[0].mxu0 %v369
      %v918 = vpop.f32.mrb[0].mxu0
      %v919 = vadd.f32 %v758, %v918
      %v920 = vpop.f32.mrb[0].mxu0
      %v921 = vpop.f32.mrb[0].mxu0
      %v922 = vadd.f32 %v761, %v921
      %v923 = vpop.f32.mrb[0].mxu0
      %924 = vmatprep.mubr.bf16.mxu0 %v374
      %925 = vmatmul.mubr.bf16.gmra.mrb[0].mxu0 %v373
      %v926 = vpop.f32.mrb[0].mxu0
      %v927 = vadd.f32 %v766, %v926
      %v928 = vpop.f32.mrb[0].mxu0
      %v929 = vpop.f32.mrb[0].mxu0
      %v930 = vadd.f32 %v769, %v929
      %v931 = vpop.f32.mrb[0].mxu0
      %932 = vmatprep.mubr.bf16.mxu0 %v378
      %933 = vmatmul.mubr.bf16.gmra.mrb[0].mxu0 %v377
      %v934 = vpop.f32.mrb[0].mxu0
      %v935 = vadd.f32 %v774, %v934
      %v936 = vpop.f32.mrb[0].mxu0
      %v937 = vpop.f32.mrb[0].mxu0
      %v938 = vadd.f32 %v777, %v937
      %v939 = vpop.f32.mrb[0].mxu0
      %940 = vmatprep.mubr.bf16.mxu0 %v382
      %941 = vmatmul.mubr.bf16.gmra.mrb[0].mxu0 %v381
      %v942 = vpop.f32.mrb[0].mxu0
      %v943 = vadd.f32 %v782, %v942
      %v944 = vpop.f32.mrb[0].mxu0
      %v945 = vpop.f32.mrb[0].mxu0
      %v946 = vadd.f32 %v785, %v945
      %v947 = vpop.f32.mrb[0].mxu0
      %948 = vmatprep.mubr.bf16.mxu0 %v386
      %949 = vmatmul.mubr.bf16.gmra.mrb[0].mxu0 %v385
      %v950 = vpop.f32.mrb[0].mxu0
      %v951 = vadd.f32 %v790, %v950
      %v952 = vpop.f32.mrb[0].mxu0
      %v953 = vpop.f32.mrb[0].mxu0
      %v954 = vadd.f32 %v793, %v953
      %v955 = vpop.f32.mrb[0].mxu0
      %956 = vmatprep.mubr.bf16.mxu0 %v390
      %957 = vmatmul.mubr.bf16.gmra.mrb[0].mxu0 %v389
      %v958 = vpop.f32.mrb[0].mxu0
      %v959 = vadd.f32 %v798, %v958
      %v960 = vpop.f32.mrb[0].mxu0
      %v961 = vpop.f32.mrb[0].mxu0
      %v962 = vadd.f32 %v801, %v961
      %v963 = vpop.f32.mrb[0].mxu0
      %964 = vmatprep.mubr.bf16.mxu0 %v394
      %965 = vmatmul.mubr.bf16.gmra.mrb[0].mxu0 %v393
      %v966 = vpop.f32.mrb[0].mxu0
      %v967 = vadd.f32 %v806, %v966
      %v968 = vpop.f32.mrb[0].mxu0
      %v969 = vpop.f32.mrb[0].mxu0
      %v970 = vadd.f32 %v809, %v969
      %v971 = vpop.f32.mrb[0].mxu0
      %972 = vdwg.mxu0
      %v973 = vld [vmem:[%s280] sm:$0xff]
      %v974 = vld [vmem:[%s280 + $0x8] sm:$0xff]
      %v975 = vld [vmem:[%s280 + $0x10] sm:$0xff]
      %v976 = vld [vmem:[%s280 + $0x18] sm:$0xff]
      %v977 = vld [vmem:[%s280 + $0x20] sm:$0xff]
      %v978 = vld [vmem:[%s280 + $0x28] sm:$0xff]
      %v979 = vld [vmem:[%s280 + $0x30] sm:$0xff]
      %v980 = vld [vmem:[%s280 + $0x38] sm:$0xff]
      %v981 = vld [vmem:[%s280 + $0x40] sm:$0xff]
      %v982 = vld [vmem:[%s280 + $0x48] sm:$0xff]
      %v983 = vld [vmem:[%s280 + $0x50] sm:$0xff]
      %v984 = vld [vmem:[%s280 + $0x58] sm:$0xff]
      %v985 = vld [vmem:[%s280 + $0x60] sm:$0xff]
      %v986 = vld [vmem:[%s280 + $0x68] sm:$0xff]
      %v987 = vld [vmem:[%s280 + $0x70] sm:$0xff]
      %v988 = vld [vmem:[%s280 + $0x78] sm:$0xff]
      %v989 = vld [vmem:[%s280 + $0x80] sm:$0xff]
      %v990 = vld [vmem:[%s280 + $0x88] sm:$0xff]
      %v991 = vld [vmem:[%s280 + $0x90] sm:$0xff]
      %v992 = vld [vmem:[%s280 + $0x98] sm:$0xff]
      %v993 = vld [vmem:[%s280 + $0xa0] sm:$0xff]
      %v994 = vld [vmem:[%s280 + $0xa8] sm:$0xff]
      %v995 = vld [vmem:[%s280 + $0xb0] sm:$0xff]
      %v996 = vld [vmem:[%s280 + $0xb8] sm:$0xff]
      %v997 = vld [vmem:[%s280 + $0xc0] sm:$0xff]
      %v998 = vld [vmem:[%s280 + $0xc8] sm:$0xff]
      %v999 = vld [vmem:[%s280 + $0xd0] sm:$0xff]
      %v1000 = vld [vmem:[%s280 + $0xd8] sm:$0xff]
      %v1001 = vld [vmem:[%s280 + $0xe0] sm:$0xff]
      %v1002 = vld [vmem:[%s280 + $0xe8] sm:$0xff]
      %v1003 = vld [vmem:[%s280 + $0xf0] sm:$0xff]
      %v1004 = vld [vmem:[%s280 + $0xf8] sm:$0xff]
      %1006 = vset.pattern.permute.xlu0 0
      %1007 = vperm.xlu0 %1006, %v973
      %v1008 = vpop.permute.xlu0 %1007
      %1011 = vset.pattern.permute.xlu0 0
      %1012 = vperm.xlu0 %1011, %v974
      %v1013 = vpop.permute.xlu0 %1012
      %1016 = vset.pattern.permute.xlu0 0
      %1017 = vperm.xlu0 %1016, %v975
      %v1018 = vpop.permute.xlu0 %1017
      %1021 = vset.pattern.permute.xlu0 0
      %1022 = vperm.xlu0 %1021, %v976
      %v1023 = vpop.permute.xlu0 %1022
      %1026 = vset.pattern.permute.xlu0 0
      %1027 = vperm.xlu0 %1026, %v977
      %v1028 = vpop.permute.xlu0 %1027
      %1031 = vset.pattern.permute.xlu0 0
      %1032 = vperm.xlu0 %1031, %v978
      %v1033 = vpop.permute.xlu0 %1032
      %1036 = vset.pattern.permute.xlu0 0
      %1037 = vperm.xlu0 %1036, %v979
      %v1038 = vpop.permute.xlu0 %1037
      %1041 = vset.pattern.permute.xlu0 0
      %1042 = vperm.xlu0 %1041, %v980
      %v1043 = vpop.permute.xlu0 %1042
      %1046 = vset.pattern.permute.xlu0 0
      %1047 = vperm.xlu0 %1046, %v981
      %v1048 = vpop.permute.xlu0 %1047
      %1051 = vset.pattern.permute.xlu0 0
      %1052 = vperm.xlu0 %1051, %v982
      %v1053 = vpop.permute.xlu0 %1052
      %1056 = vset.pattern.permute.xlu0 0
      %1057 = vperm.xlu0 %1056, %v983
      %v1058 = vpop.permute.xlu0 %1057
      %1061 = vset.pattern.permute.xlu0 0
      %1062 = vperm.xlu0 %1061, %v984
      %v1063 = vpop.permute.xlu0 %1062
      %1066 = vset.pattern.permute.xlu0 0
      %1067 = vperm.xlu0 %1066, %v985
      %v1068 = vpop.permute.xlu0 %1067
      %1071 = vset.pattern.permute.xlu0 0
      %1072 = vperm.xlu0 %1071, %v986
      %v1073 = vpop.permute.xlu0 %1072
      %1076 = vset.pattern.permute.xlu0 0
      %1077 = vperm.xlu0 %1076, %v987
      %v1078 = vpop.permute.xlu0 %1077
      %1081 = vset.pattern.permute.xlu0 0
      %1082 = vperm.xlu0 %1081, %v988
      %v1083 = vpop.permute.xlu0 %1082
      %1086 = vset.pattern.permute.xlu0 0
      %1087 = vperm.xlu0 %1086, %v989
      %v1088 = vpop.permute.xlu0 %1087
      %1091 = vset.pattern.permute.xlu0 0
      %1092 = vperm.xlu0 %1091, %v990
      %v1093 = vpop.permute.xlu0 %1092
      %1096 = vset.pattern.permute.xlu0 0
      %1097 = vperm.xlu0 %1096, %v991
      %v1098 = vpop.permute.xlu0 %1097
      %1101 = vset.pattern.permute.xlu0 0
      %1102 = vperm.xlu0 %1101, %v992
      %v1103 = vpop.permute.xlu0 %1102
      %1106 = vset.pattern.permute.xlu0 0
      %1107 = vperm.xlu0 %1106, %v993
      %v1108 = vpop.permute.xlu0 %1107
      %1111 = vset.pattern.permute.xlu0 0
      %1112 = vperm.xlu0 %1111, %v994
      %v1113 = vpop.permute.xlu0 %1112
      %1116 = vset.pattern.permute.xlu0 0
      %1117 = vperm.xlu0 %1116, %v995
      %v1118 = vpop.permute.xlu0 %1117
      %1121 = vset.pattern.permute.xlu0 0
      %1122 = vperm.xlu0 %1121, %v996
      %v1123 = vpop.permute.xlu0 %1122
      %1126 = vset.pattern.permute.xlu0 0
      %1127 = vperm.xlu0 %1126, %v997
      %v1128 = vpop.permute.xlu0 %1127
      %1131 = vset.pattern.permute.xlu0 0
      %1132 = vperm.xlu0 %1131, %v998
      %v1133 = vpop.permute.xlu0 %1132
      %1136 = vset.pattern.permute.xlu0 0
      %1137 = vperm.xlu0 %1136, %v999
      %v1138 = vpop.permute.xlu0 %1137
      %1141 = vset.pattern.permute.xlu0 0
      %1142 = vperm.xlu0 %1141, %v1000
      %v1143 = vpop.permute.xlu0 %1142
      %1146 = vset.pattern.permute.xlu0 0
      %1147 = vperm.xlu0 %1146, %v1001
      %v1148 = vpop.permute.xlu0 %1147
      %1151 = vset.pattern.permute.xlu0 0
      %1152 = vperm.xlu0 %1151, %v1002
      %v1153 = vpop.permute.xlu0 %1152
      %1156 = vset.pattern.permute.xlu0 0
      %1157 = vperm.xlu0 %1156, %v1003
      %v1158 = vpop.permute.xlu0 %1157
      %1161 = vset.pattern.permute.xlu0 0
      %1162 = vperm.xlu0 %1161, %v1004
      %v1163 = vpop.permute.xlu0 %1162
      %v1165 = vmul.f32 %v1008, %v847
      %v1166 = vmul.f32 %v1013, %v850
      %v1167 = vmul.f32 %v1018, %v855
      %v1168 = vmul.f32 %v1023, %v858
      %v1169 = vmul.f32 %v1028, %v863
      %v1170 = vmul.f32 %v1033, %v866
      %v1171 = vmul.f32 %v1038, %v871
      %v1172 = vmul.f32 %v1043, %v874
      %v1173 = vmul.f32 %v1048, %v879
      %v1174 = vmul.f32 %v1053, %v882
      %v1175 = vmul.f32 %v1058, %v887
      %v1176 = vmul.f32 %v1063, %v890
      %v1177 = vmul.f32 %v1068, %v895
      %v1178 = vmul.f32 %v1073, %v898
      %v1179 = vmul.f32 %v1078, %v903
      %v1180 = vmul.f32 %v1083, %v906
      %v1181 = vmul.f32 %v1088, %v911
      %v1182 = vmul.f32 %v1093, %v914
      %v1183 = vmul.f32 %v1098, %v919
      %v1184 = vmul.f32 %v1103, %v922
      %v1185 = vmul.f32 %v1108, %v927
      %v1186 = vmul.f32 %v1113, %v930
      %v1187 = vmul.f32 %v1118, %v935
      %v1188 = vmul.f32 %v1123, %v938
      %v1189 = vmul.f32 %v1128, %v943
      %v1190 = vmul.f32 %v1133, %v946
      %v1191 = vmul.f32 %v1138, %v951
      %v1192 = vmul.f32 %v1143, %v954
      %v1193 = vmul.f32 %v1148, %v959
      %v1194 = vmul.f32 %v1153, %v962
      %v1195 = vmul.f32 %v1158, %v967
      %v1196 = vmul.f32 %v1163, %v970
      %v1197 = vpack.c.bf16 %v1166, %v1165
      %v1198 = vpack.c.bf16 %v1168, %v1167
      %v1199 = vpack.c.bf16 %v1170, %v1169
      %v1200 = vpack.c.bf16 %v1172, %v1171
      %v1201 = vpack.c.bf16 %v1174, %v1173
      %v1202 = vpack.c.bf16 %v1176, %v1175
      %v1203 = vpack.c.bf16 %v1178, %v1177
      %v1204 = vpack.c.bf16 %v1180, %v1179
      %v1205 = vpack.c.bf16 %v1182, %v1181
      %v1206 = vpack.c.bf16 %v1184, %v1183
      %v1207 = vpack.c.bf16 %v1186, %v1185
      %v1208 = vpack.c.bf16 %v1188, %v1187
      %v1209 = vpack.c.bf16 %v1190, %v1189
      %v1210 = vpack.c.bf16 %v1192, %v1191
      %v1211 = vpack.c.bf16 %v1194, %v1193
      %v1212 = vpack.c.bf16 %v1196, %v1195
      %v1213 = vld [vmem:[%s3] sm:$0xff]
      %v1214 = vld [vmem:[%s3 + $0x8] sm:$0xff]
      %v1215 = vld [vmem:[%s3 + $0x10] sm:$0xff]
      %v1216 = vld [vmem:[%s3 + $0x18] sm:$0xff]
      %v1217 = vld [vmem:[%s3 + $0x20] sm:$0xff]
      %v1218 = vld [vmem:[%s3 + $0x28] sm:$0xff]
      %v1219 = vld [vmem:[%s3 + $0x30] sm:$0xff]
      %v1220 = vld [vmem:[%s3 + $0x38] sm:$0xff]
      %v1221 = vld [vmem:[%s3 + $0x40] sm:$0xff]
      %v1222 = vld [vmem:[%s3 + $0x48] sm:$0xff]
      %v1223 = vld [vmem:[%s3 + $0x50] sm:$0xff]
      %v1224 = vld [vmem:[%s3 + $0x58] sm:$0xff]
      %v1225 = vld [vmem:[%s3 + $0x60] sm:$0xff]
      %v1226 = vld [vmem:[%s3 + $0x68] sm:$0xff]
      %v1227 = vld [vmem:[%s3 + $0x70] sm:$0xff]
      %v1228 = vld [vmem:[%s3 + $0x78] sm:$0xff]
      %v1245 = vunpack.c.l.b16 %v1213
      %v1246 = vunpack.c.h.b16 %v1213
      %v1247 = vunpack.c.l.b16 %v1214
      %v1248 = vunpack.c.h.b16 %v1214
      %v1249 = vunpack.c.l.b16 %v1215
      %v1250 = vunpack.c.h.b16 %v1215
      %v1251 = vunpack.c.l.b16 %v1216
      %v1252 = vunpack.c.h.b16 %v1216
      %v1253 = vunpack.c.l.b16 %v1217
      %v1254 = vunpack.c.h.b16 %v1217
      %v1255 = vunpack.c.l.b16 %v1218
      %v1256 = vunpack.c.h.b16 %v1218
      %v1257 = vunpack.c.l.b16 %v1219
      %v1258 = vunpack.c.h.b16 %v1219
      %v1259 = vunpack.c.l.b16 %v1220
      %v1260 = vunpack.c.h.b16 %v1220
      %v1261 = vunpack.c.l.b16 %v1221
      %v1262 = vunpack.c.h.b16 %v1221
      %v1263 = vunpack.c.l.b16 %v1222
      %v1264 = vunpack.c.h.b16 %v1222
      %v1265 = vunpack.c.l.b16 %v1223
      %v1266 = vunpack.c.h.b16 %v1223
      %v1267 = vunpack.c.l.b16 %v1224
      %v1268 = vunpack.c.h.b16 %v1224
      %v1269 = vunpack.c.l.b16 %v1225
      %v1270 = vunpack.c.h.b16 %v1225
      %v1271 = vunpack.c.l.b16 %v1226
      %v1272 = vunpack.c.h.b16 %v1226
      %v1273 = vunpack.c.l.b16 %v1227
      %v1274 = vunpack.c.h.b16 %v1227
      %v1275 = vunpack.c.l.b16 %v1228
      %v1276 = vunpack.c.h.b16 %v1228
      %v1277 = vpack.c.b16 %v1247, %v1245
      %v1278 = vpack.c.b16 %v1248, %v1246
      %v1279 = vpack.c.b16 %v1251, %v1249
      %v1280 = vpack.c.b16 %v1252, %v1250
      %v1281 = vpack.c.b16 %v1255, %v1253
      %v1282 = vpack.c.b16 %v1256, %v1254
      %v1283 = vpack.c.b16 %v1259, %v1257
      %v1284 = vpack.c.b16 %v1260, %v1258
      %v1285 = vpack.c.b16 %v1263, %v1261
      %v1286 = vpack.c.b16 %v1264, %v1262
      %v1287 = vpack.c.b16 %v1267, %v1265
      %v1288 = vpack.c.b16 %v1268, %v1266
      %v1289 = vpack.c.b16 %v1271, %v1269
      %v1290 = vpack.c.b16 %v1272, %v1270
      %v1291 = vpack.c.b16 %v1275, %v1273
      %v1292 = vpack.c.b16 %v1276, %v1274
      %1309 = vmatprep.subr.bf16.mxu0 %v1278
      %1310 = vmatpush1.bf16.msra.mxu0 %v1277
      %1311 = vmatprep.subr.bf16.mxu0 %v1280
      %1312 = vmatpush1.bf16.msra.mxu0 %v1279
      %1313 = vmatprep.subr.bf16.mxu0 %v1282
      %1314 = vmatpush1.bf16.msra.mxu0 %v1281
      %1315 = vmatprep.subr.bf16.mxu0 %v1284
      %1316 = vmatpush1.bf16.msra.mxu0 %v1283
      %1317 = vmatprep.subr.bf16.mxu0 %v1286
      %1318 = vmatpush1.bf16.msra.mxu0 %v1285
      %1319 = vmatprep.subr.bf16.mxu0 %v1288
      %1320 = vmatpush1.bf16.msra.mxu0 %v1287
      %1321 = vmatprep.subr.bf16.mxu0 %v1290
      %1322 = vmatpush1.bf16.msra.mxu0 %v1289
      %1323 = vmatprep.subr.bf16.mxu0 %v1292
      %1324 = vmatpush1.bf16.msra.mxu0 %v1291
      %1325 = vmatprep.subr.bf16.mxu0 0
      %1326 = vmatpush1.bf16.msra.mxu0 0
      %1327 = vmatprep.subr.bf16.mxu0 0
      %1328 = vmatpush1.bf16.msra.mxu0 0
      %1329 = vmatprep.subr.bf16.mxu0 0
      %1330 = vmatpush1.bf16.msra.mxu0 0
      %1331 = vmatprep.subr.bf16.mxu0 0
      %1332 = vmatpush1.bf16.msra.mxu0 0
      %1333 = vmatprep.subr.bf16.mxu0 0
      %1334 = vmatpush1.bf16.msra.mxu0 0
      %1335 = vmatprep.subr.bf16.mxu0 0
      %1336 = vmatpush1.bf16.msra.mxu0 0
      %1337 = vmatprep.subr.bf16.mxu0 0
      %1338 = vmatpush1.bf16.msra.mxu0 0
      %1339 = vmatprep.subr.bf16.mxu0 0
      %1340 = vmatpush1.bf16.msra.mxu0 0
      %1341 = vmatprep.mubr.bf16.mxu0 0
      %1342 = vmatmul.mubr.bf16.gmra.mrb[0].mxu0 %v1197
      %v1343 = vpop.f32.mrb[0].mxu0
      %v1344 = vadd.f32 0.0, %v1343
      %v1345 = vpop.f32.mrb[0].mxu0
      %v1346 = vadd.f32 0.0, %v1345
      %v1347 = vpop.f32.mrb[0].mxu0
      %v1348 = vadd.f32 0.0, %v1347
      %v1349 = vpop.f32.mrb[0].mxu0
      %v1350 = vadd.f32 0.0, %v1349
      %1351 = vmatprep.mubr.bf16.mxu0 0
      %1352 = vmatmul.mubr.bf16.gmra.mrb[0].mxu0 %v1198
      %v1353 = vpop.f32.mrb[0].mxu0
      %v1354 = vadd.f32 0.0, %v1353
      %v1355 = vpop.f32.mrb[0].mxu0
      %v1356 = vadd.f32 0.0, %v1355
      %v1357 = vpop.f32.mrb[0].mxu0
      %v1358 = vadd.f32 0.0, %v1357
      %v1359 = vpop.f32.mrb[0].mxu0
      %v1360 = vadd.f32 0.0, %v1359
      %1361 = vmatprep.mubr.bf16.mxu0 0
      %1362 = vmatmul.mubr.bf16.gmra.mrb[0].mxu0 %v1199
      %v1363 = vpop.f32.mrb[0].mxu0
      %v1364 = vadd.f32 0.0, %v1363
      %v1365 = vpop.f32.mrb[0].mxu0
      %v1366 = vadd.f32 0.0, %v1365
      %v1367 = vpop.f32.mrb[0].mxu0
      %v1368 = vadd.f32 0.0, %v1367
      %v1369 = vpop.f32.mrb[0].mxu0
      %v1370 = vadd.f32 0.0, %v1369
      %1371 = vmatprep.mubr.bf16.mxu0 0
      %1372 = vmatmul.mubr.bf16.gmra.mrb[0].mxu0 %v1200
      %v1373 = vpop.f32.mrb[0].mxu0
      %v1374 = vadd.f32 0.0, %v1373
      %v1375 = vpop.f32.mrb[0].mxu0
      %v1376 = vadd.f32 0.0, %v1375
      %v1377 = vpop.f32.mrb[0].mxu0
      %v1378 = vadd.f32 0.0, %v1377
      %v1379 = vpop.f32.mrb[0].mxu0
      %v1380 = vadd.f32 0.0, %v1379
      %1381 = vmatprep.mubr.bf16.mxu0 0
      %1382 = vmatmul.mubr.bf16.gmra.mrb[0].mxu0 %v1201
      %v1383 = vpop.f32.mrb[0].mxu0
      %v1384 = vadd.f32 0.0, %v1383
      %v1385 = vpop.f32.mrb[0].mxu0
      %v1386 = vadd.f32 0.0, %v1385
      %v1387 = vpop.f32.mrb[0].mxu0
      %v1388 = vadd.f32 0.0, %v1387
      %v1389 = vpop.f32.mrb[0].mxu0
      %v1390 = vadd.f32 0.0, %v1389
      %1391 = vmatprep.mubr.bf16.mxu0 0
      %1392 = vmatmul.mubr.bf16.gmra.mrb[0].mxu0 %v1202
      %v1393 = vpop.f32.mrb[0].mxu0
      %v1394 = vadd.f32 0.0, %v1393
      %v1395 = vpop.f32.mrb[0].mxu0
      %v1396 = vadd.f32 0.0, %v1395
      %v1397 = vpop.f32.mrb[0].mxu0
      %v1398 = vadd.f32 0.0, %v1397
      %v1399 = vpop.f32.mrb[0].mxu0
      %v1400 = vadd.f32 0.0, %v1399
      %1401 = vmatprep.mubr.bf16.mxu0 0
      %1402 = vmatmul.mubr.bf16.gmra.mrb[0].mxu0 %v1203
      %v1403 = vpop.f32.mrb[0].mxu0
      %v1404 = vadd.f32 0.0, %v1403
      %v1405 = vpop.f32.mrb[0].mxu0
      %v1406 = vadd.f32 0.0, %v1405
      %v1407 = vpop.f32.mrb[0].mxu0
      %v1408 = vadd.f32 0.0, %v1407
      %v1409 = vpop.f32.mrb[0].mxu0
      %v1410 = vadd.f32 0.0, %v1409
      %1411 = vmatprep.mubr.bf16.mxu0 0
      %1412 = vmatmul.mubr.bf16.gmra.mrb[0].mxu0 %v1204
      %v1413 = vpop.f32.mrb[0].mxu0
      %v1414 = vadd.f32 0.0, %v1413
      %v1415 = vpop.f32.mrb[0].mxu0
      %v1416 = vadd.f32 0.0, %v1415
      %v1417 = vpop.f32.mrb[0].mxu0
      %v1418 = vadd.f32 0.0, %v1417
      %v1419 = vpop.f32.mrb[0].mxu0
      %v1420 = vadd.f32 0.0, %v1419
      %1421 = vmatprep.mubr.bf16.mxu0 0
      %1422 = vmatmul.mubr.bf16.gmra.mrb[0].mxu0 %v1205
      %v1423 = vpop.f32.mrb[0].mxu0
      %v1424 = vadd.f32 0.0, %v1423
      %v1425 = vpop.f32.mrb[0].mxu0
      %v1426 = vadd.f32 0.0, %v1425
      %v1427 = vpop.f32.mrb[0].mxu0
      %v1428 = vadd.f32 0.0, %v1427
      %v1429 = vpop.f32.mrb[0].mxu0
      %v1430 = vadd.f32 0.0, %v1429
      %1431 = vmatprep.mubr.bf16.mxu0 0
      %1432 = vmatmul.mubr.bf16.gmra.mrb[0].mxu0 %v1206
      %v1433 = vpop.f32.mrb[0].mxu0
      %v1434 = vadd.f32 0.0, %v1433
      %v1435 = vpop.f32.mrb[0].mxu0
      %v1436 = vadd.f32 0.0, %v1435
      %v1437 = vpop.f32.mrb[0].mxu0
      %v1438 = vadd.f32 0.0, %v1437
      %v1439 = vpop.f32.mrb[0].mxu0
      %v1440 = vadd.f32 0.0, %v1439
      %1441 = vmatprep.mubr.bf16.mxu0 0
      %1442 = vmatmul.mubr.bf16.gmra.mrb[0].mxu0 %v1207
      %v1443 = vpop.f32.mrb[0].mxu0
      %v1444 = vadd.f32 0.0, %v1443
      %v1445 = vpop.f32.mrb[0].mxu0
      %v1446 = vadd.f32 0.0, %v1445
      %v1447 = vpop.f32.mrb[0].mxu0
      %v1448 = vadd.f32 0.0, %v1447
      %v1449 = vpop.f32.mrb[0].mxu0
      %v1450 = vadd.f32 0.0, %v1449
      %1451 = vmatprep.mubr.bf16.mxu0 0
      %1452 = vmatmul.mubr.bf16.gmra.mrb[0].mxu0 %v1208
      %v1453 = vpop.f32.mrb[0].mxu0
      %v1454 = vadd.f32 0.0, %v1453
      %v1455 = vpop.f32.mrb[0].mxu0
      %v1456 = vadd.f32 0.0, %v1455
      %v1457 = vpop.f32.mrb[0].mxu0
      %v1458 = vadd.f32 0.0, %v1457
      %v1459 = vpop.f32.mrb[0].mxu0
      %v1460 = vadd.f32 0.0, %v1459
      %1461 = vmatprep.mubr.bf16.mxu0 0
      %1462 = vmatmul.mubr.bf16.gmra.mrb[0].mxu0 %v1209
      %v1463 = vpop.f32.mrb[0].mxu0
      %v1464 = vadd.f32 0.0, %v1463
      %v1465 = vpop.f32.mrb[0].mxu0
      %v1466 = vadd.f32 0.0, %v1465
      %v1467 = vpop.f32.mrb[0].mxu0
      %v1468 = vadd.f32 0.0, %v1467
      %v1469 = vpop.f32.mrb[0].mxu0
      %v1470 = vadd.f32 0.0, %v1469
      %1471 = vmatprep.mubr.bf16.mxu0 0
      %1472 = vmatmul.mubr.bf16.gmra.mrb[0].mxu0 %v1210
      %v1473 = vpop.f32.mrb[0].mxu0
      %v1474 = vadd.f32 0.0, %v1473
      %v1475 = vpop.f32.mrb[0].mxu0
      %v1476 = vadd.f32 0.0, %v1475
      %v1477 = vpop.f32.mrb[0].mxu0
      %v1478 = vadd.f32 0.0, %v1477
      %v1479 = vpop.f32.mrb[0].mxu0
      %v1480 = vadd.f32 0.0, %v1479
      %1481 = vmatprep.mubr.bf16.mxu0 0
      %1482 = vmatmul.mubr.bf16.gmra.mrb[0].mxu0 %v1211
      %v1483 = vpop.f32.mrb[0].mxu0
      %v1484 = vadd.f32 0.0, %v1483
      %v1485 = vpop.f32.mrb[0].mxu0
      %v1486 = vadd.f32 0.0, %v1485
      %v1487 = vpop.f32.mrb[0].mxu0
      %v1488 = vadd.f32 0.0, %v1487
      %v1489 = vpop.f32.mrb[0].mxu0
      %v1490 = vadd.f32 0.0, %v1489
      %1491 = vmatprep.mubr.bf16.mxu0 0
      %1492 = vmatmul.mubr.bf16.gmra.mrb[0].mxu0 %v1212
      %v1493 = vpop.f32.mrb[0].mxu0
      %v1494 = vadd.f32 0.0, %v1493
      %v1495 = vpop.f32.mrb[0].mxu0
      %v1496 = vadd.f32 0.0, %v1495
      %v1497 = vpop.f32.mrb[0].mxu0
      %v1498 = vadd.f32 0.0, %v1497
      %v1499 = vpop.f32.mrb[0].mxu0
      %v1500 = vadd.f32 0.0, %v1499
      %1501 = vdwg.mxu0
      %v1502 = vmax.f32 %v1344, 0.0
      %v1503 = vmax.f32 %v1346, 0.0
      %v1504 = vmax.f32 %v1348, 0.0
      %v1505 = vmax.f32 %v1350, 0.0
      %v1506 = vmax.f32 %v1354, 0.0
      %v1507 = vmax.f32 %v1356, 0.0
      %v1508 = vmax.f32 %v1358, 0.0
      %v1509 = vmax.f32 %v1360, 0.0
      %v1510 = vmax.f32 %v1364, 0.0
      %v1511 = vmax.f32 %v1366, 0.0
      %v1512 = vmax.f32 %v1368, 0.0
      %v1513 = vmax.f32 %v1370, 0.0
      %v1514 = vmax.f32 %v1374, 0.0
      %v1515 = vmax.f32 %v1376, 0.0
      %v1516 = vmax.f32 %v1378, 0.0
      %v1517 = vmax.f32 %v1380, 0.0
      %v1518 = vmax.f32 %v1384, 0.0
      %v1519 = vmax.f32 %v1386, 0.0
      %v1520 = vmax.f32 %v1388, 0.0
      %v1521 = vmax.f32 %v1390, 0.0
      %v1522 = vmax.f32 %v1394, 0.0
      %v1523 = vmax.f32 %v1396, 0.0
      %v1524 = vmax.f32 %v1398, 0.0
      %v1525 = vmax.f32 %v1400, 0.0
      %v1526 = vmax.f32 %v1404, 0.0
      %v1527 = vmax.f32 %v1406, 0.0
      %v1528 = vmax.f32 %v1408, 0.0
      %v1529 = vmax.f32 %v1410, 0.0
      %v1530 = vmax.f32 %v1414, 0.0
      %v1531 = vmax.f32 %v1416, 0.0
      %v1532 = vmax.f32 %v1418, 0.0
      %v1533 = vmax.f32 %v1420, 0.0
      %v1534 = vmax.f32 %v1424, 0.0
      %v1535 = vmax.f32 %v1426, 0.0
      %v1536 = vmax.f32 %v1428, 0.0
      %v1537 = vmax.f32 %v1430, 0.0
      %v1538 = vmax.f32 %v1434, 0.0
      %v1539 = vmax.f32 %v1436, 0.0
      %v1540 = vmax.f32 %v1438, 0.0
      %v1541 = vmax.f32 %v1440, 0.0
      %v1542 = vmax.f32 %v1444, 0.0
      %v1543 = vmax.f32 %v1446, 0.0
      %v1544 = vmax.f32 %v1448, 0.0
      %v1545 = vmax.f32 %v1450, 0.0
      %v1546 = vmax.f32 %v1454, 0.0
      %v1547 = vmax.f32 %v1456, 0.0
      %v1548 = vmax.f32 %v1458, 0.0
      %v1549 = vmax.f32 %v1460, 0.0
      %v1550 = vmax.f32 %v1464, 0.0
      %v1551 = vmax.f32 %v1466, 0.0
      %v1552 = vmax.f32 %v1468, 0.0
      %v1553 = vmax.f32 %v1470, 0.0
      %v1554 = vmax.f32 %v1474, 0.0
      %v1555 = vmax.f32 %v1476, 0.0
      %v1556 = vmax.f32 %v1478, 0.0
      %v1557 = vmax.f32 %v1480, 0.0
      %v1558 = vmax.f32 %v1484, 0.0
      %v1559 = vmax.f32 %v1486, 0.0
      %v1560 = vmax.f32 %v1488, 0.0
      %v1561 = vmax.f32 %v1490, 0.0
      %v1562 = vmax.f32 %v1494, 0.0
      %v1563 = vmax.f32 %v1496, 0.0
      %v1564 = vmax.f32 %v1498, 0.0
      %v1565 = vmax.f32 %v1500, 0.0
      %v1566 = vpack.c.bf16 %v1504, %v1502
      %v1567 = vpack.c.bf16 %v1505, %v1503
      %v1568 = vpack.c.bf16 %v1508, %v1506
      %v1569 = vpack.c.bf16 %v1509, %v1507
      %v1570 = vpack.c.bf16 %v1512, %v1510
      %v1571 = vpack.c.bf16 %v1513, %v1511
      %v1572 = vpack.c.bf16 %v1516, %v1514
      %v1573 = vpack.c.bf16 %v1517, %v1515
      %v1574 = vpack.c.bf16 %v1520, %v1518
      %v1575 = vpack.c.bf16 %v1521, %v1519
      %v1576 = vpack.c.bf16 %v1524, %v1522
      %v1577 = vpack.c.bf16 %v1525, %v1523
      %v1578 = vpack.c.bf16 %v1528, %v1526
      %v1579 = vpack.c.bf16 %v1529, %v1527
      %v1580 = vpack.c.bf16 %v1532, %v1530
      %v1581 = vpack.c.bf16 %v1533, %v1531
      %v1582 = vpack.c.bf16 %v1536, %v1534
      %v1583 = vpack.c.bf16 %v1537, %v1535
      %v1584 = vpack.c.bf16 %v1540, %v1538
      %v1585 = vpack.c.bf16 %v1541, %v1539
      %v1586 = vpack.c.bf16 %v1544, %v1542
      %v1587 = vpack.c.bf16 %v1545, %v1543
      %v1588 = vpack.c.bf16 %v1548, %v1546
      %v1589 = vpack.c.bf16 %v1549, %v1547
      %v1590 = vpack.c.bf16 %v1552, %v1550
      %v1591 = vpack.c.bf16 %v1553, %v1551
      %v1592 = vpack.c.bf16 %v1556, %v1554
      %v1593 = vpack.c.bf16 %v1557, %v1555
      %v1594 = vpack.c.bf16 %v1560, %v1558
      %v1595 = vpack.c.bf16 %v1561, %v1559
      %v1596 = vpack.c.bf16 %v1564, %v1562
      %v1597 = vpack.c.bf16 %v1565, %v1563
      %1598 = vst [vmem:[%s296] sm:$0xff] %v1566
      %1599 = vst [vmem:[%s296 + $0x8] sm:$0xff] %v1567
      %1600 = vst [vmem:[%s296 + $0x10] sm:$0xff] %v1568
      %1601 = vst [vmem:[%s296 + $0x18] sm:$0xff] %v1569
      %1602 = vst [vmem:[%s296 + $0x20] sm:$0xff] %v1570
      %1603 = vst [vmem:[%s296 + $0x28] sm:$0xff] %v1571
      %1604 = vst [vmem:[%s296 + $0x30] sm:$0xff] %v1572
      %1605 = vst [vmem:[%s296 + $0x38] sm:$0xff] %v1573
      %1606 = vst [vmem:[%s296 + $0x40] sm:$0xff] %v1574
      %1607 = vst [vmem:[%s296 + $0x48] sm:$0xff] %v1575
      %1608 = vst [vmem:[%s296 + $0x50] sm:$0xff] %v1576
      %1609 = vst [vmem:[%s296 + $0x58] sm:$0xff] %v1577
      %1610 = vst [vmem:[%s296 + $0x60] sm:$0xff] %v1578
      %1611 = vst [vmem:[%s296 + $0x68] sm:$0xff] %v1579
      %1612 = vst [vmem:[%s296 + $0x70] sm:$0xff] %v1580
      %1613 = vst [vmem:[%s296 + $0x78] sm:$0xff] %v1581
      %1614 = vst [vmem:[%s296 + $0x80] sm:$0xff] %v1582
      %1615 = vst [vmem:[%s296 + $0x88] sm:$0xff] %v1583
      %1616 = vst [vmem:[%s296 + $0x90] sm:$0xff] %v1584
      %1617 = vst [vmem:[%s296 + $0x98] sm:$0xff] %v1585
      %1618 = vst [vmem:[%s296 + $0xa0] sm:$0xff] %v1586
      %1619 = vst [vmem:[%s296 + $0xa8] sm:$0xff] %v1587
      %1620 = vst [vmem:[%s296 + $0xb0] sm:$0xff] %v1588
      %1621 = vst [vmem:[%s296 + $0xb8] sm:$0xff] %v1589
      %1622 = vst [vmem:[%s296 + $0xc0] sm:$0xff] %v1590
      %1623 = vst [vmem:[%s296 + $0xc8] sm:$0xff] %v1591
      %1624 = vst [vmem:[%s296 + $0xd0] sm:$0xff] %v1592
      %1625 = vst [vmem:[%s296 + $0xd8] sm:$0xff] %v1593
      %1626 = vst [vmem:[%s296 + $0xe0] sm:$0xff] %v1594
      %1627 = vst [vmem:[%s296 + $0xe8] sm:$0xff] %v1595
      %1628 = vst [vmem:[%s296 + $0xf0] sm:$0xff] %v1596
      %1629 = vst [vmem:[%s296 + $0xf8] sm:$0xff] %v1597
      %s1630 = smul.u32 16, %s20
      %p1631 = scmp.lt.s32.totalorder %s19, 1
      %s1632 = scalar_select %p1631, %s19, 1
      %p1633 = scmp.lt.s32.totalorder %s1630, 31
      %s1634 = scalar_select %p1633, %s1630, 31
      %s1635 = smul.addr %s1634, 2
      %s1636 = smul.addr %s1632, 64
      %s1637 = sadd.s32 %s1635, %s1636
      %s1638 = smul.addr %s1637, 8
      %s1639 = scalar_lea.vmem %s4, %s1638
      // Predicated region
      $region37: #{gcn_encoder.2} parent=35 // pred_check
        %p1640 = pneg %p150
      $region38: #{gcn_encoder.2} parent=35 // pred_check_branch
        %1642 = sbr.rel (%p1640) target = $region40
      $region39: #{gcn_encoder.2} parent=35 // pred_region
        %s1643 = smul.u32 16, %s20
      $region40: #{gcn_encoder.2} parent=35 // pred_fallthru
        _
    $region36: #{gcn_encoder.2} parent=5 // pred_fallthru
      _
    %p1644 = scmp.le.s32.totalorder 2, %s10
    // Predicated region
    $region41: #{gcn_encoder.2} parent=5 // pred_check
      %p1645 = pneg %p1644
    $region42: #{gcn_encoder.2} parent=5 // pred_check_branch
      %1647 = sbr.rel (%p1645) target = $region44
    $region43: #{gcn_encoder.2} parent=5 // pred_region
      %s1648 = ssub.s32 %s10, 2
      // Predicated region
      $region45: #{gcn_encoder.2} parent=43 // pred_check
        %p1649 = pneg %p156
      $region46: #{gcn_encoder.2} parent=43 // pred_check_branch
        %1651 = sbr.rel (%p1649) target = $region48
      $region47: #{gcn_encoder.2} parent=43 // pred_region
        %s1652 = smul.u32 16, %s22
        %p1653 = scmp.lt.s32.totalorder %s21, 1
        %s1654 = scalar_select %p1653, %s21, 1
        %p1655 = scmp.lt.s32.totalorder %s1652, 31
        %s1656 = scalar_select %p1655, %s1652, 31
        %s1657 = smul.addr %s1656, 2
        %s1658 = smul.addr %s1654, 64
        %s1659 = sadd.s32 %s1657, %s1658
        %s1660 = smul.addr %s1659, 8
        %s1661 = scalar_lea.vmem %s4, %s1660
      $region48: #{gcn_encoder.2} parent=43 // pred_fallthru
        _
    $region44: #{gcn_encoder.2} parent=5 // pred_fallthru
      _
  $region6: #{gcn_encoder.2} parent=0 // loop_footer
    %s14 = sadd.s32 1, %s10
  $region7: #{gcn_encoder.2} parent=0 // loop_footer_branch
    %9 = sbr.rel target = $region3
  $region8: #{gcn_encoder.2} parent=0 // loop_exit
    _

</llo_original>
